<compile_context>
chip_gen: v7x
topology: tpu7x:2x2x1
jax: 0.10.0
libtpu: 0.0.40
codegen_flags: <defaults>
</compile_context>

<pallas_src>
import jax
import jax.numpy as jnp
from jax.experimental import pallas as pl
from jax.experimental.pallas import tpu as pltpu


# ---------------- Pallas kernels ----------------

def _second_layer(h, w2t):
    """Conv2 as a 2-row contraction: VPU multiply + sublane reduce.

    h: (512, T) f32, w2t: (512, 2).  jnp.dot(w2, h) would make the large h the
    stationary (weight-push) MXU operand amortised over only 2 streamed rows;
    doing it on the VALU/XLU slots instead overlaps with the Conv1 MXU work.
    """
    o0 = jnp.sum(w2t[:, 0:1] * h, axis=0, keepdims=True)   # (1, T)
    o1 = jnp.sum(w2t[:, 1:2] * h, axis=0, keepdims=True)   # (1, T)
    return jnp.concatenate([o0, o1], axis=0)                # (2, T) f32


def _da_head_kernel(x_ref, w1_ref, w2t_ref, o_ref):
    # x_ref: (1, C, T); w1_ref: (512, C) bf16; w2t_ref: (512, 2) f32; o_ref: (1, 2, T)
    x = x_ref[0].astype(jnp.bfloat16)                       # (C, T) bf16 -> MXU rate
    h = jnp.maximum(
        jnp.dot(w1_ref[...], x, preferred_element_type=jnp.float32), 0.0)
    o_ref[0] = _second_layer(h, w2t_ref[...]).astype(o_ref.dtype)


def _da_head_focal_kernel(x_ref, w1_ref, w2t_ref, coef_ref, o_ref, f_ref):
    # coef_ref: (5, T) f32 rows = [self_w, nxt_w, prv_w, bias, parity(1=even lane)]
    x = x_ref[0].astype(jnp.bfloat16)
    h = jnp.maximum(
        jnp.dot(w1_ref[...], x, preferred_element_type=jnp.float32), 0.0)
    out = _second_layer(h, w2t_ref[...])                    # (2, T) f32
    o_ref[0] = out.astype(o_ref.dtype)

    # Fused nn.Linear(2, 2) on x.view(-1, 2): with H*W even, flat-NCHW pairs
    # are (even lane p, lane p+1) of the same channel row, so:
    #   even lane p: w00*out[p]   + w01*out[p+1] + b0
    #   odd  lane p: w10*out[p-1] + w11*out[p]   + b1
    # Roll wrap-around / partial-tile garbage lanes are never selected for a
    # valid output lane (even lanes only read p+1, odd lanes only read p-1,
    # and the neighbour term is a true select, not a multiply-by-zero).
    coef = coef_ref[...]
    t = out.shape[1]
    prv = pltpu.roll(out, shift=1, axis=1)        # lane p -> out[:, p - 1]
    nxt = pltpu.roll(out, shift=t - 1, axis=1)    # lane p -> out[:, p + 1]
    is_even = coef[4:5, :] > 0.5
    neigh = jnp.where(is_even, coef[1:2, :] * nxt, coef[2:3, :] * prv)
    f = out * coef[0:1, :] + neigh + coef[3:4, :]
    f_ref[0] = f.astype(f_ref.dtype)


# ---------------- hardware / tiling helpers ----------------

def _tpu_vmem_capacity_bytes():
    try:
        info = pltpu.get_tpu_info()
        cap = getattr(info, "vmem_capacity_bytes", None)
        if cap:
            return int(cap)
    except Exception:
        pass
    return 64 << 20  # conservative (v7x per-TensorCore)


def _tpu_num_cores_guess(cap_bytes):
    try:
        info = pltpu.get_tpu_info()
        for attr in ("num_tensorcores", "tensorcores_per_chip", "num_cores"):
            v = getattr(info, attr, None)
            if v:
                return int(v)
    except Exception:
        pass
    # v7x-class parts expose 64 MiB VMEM per TensorCore and have 2 TCs/chip.
    return 2 if cap_bytes <= (64 << 20) else 1


def _vmem_need(t, c, x_itemsize, out_itemsize):
    need = 2 * c * t * x_itemsize            # double-buffered x tile
    need += 2 * 512 * c * 2                  # double-buffered w1 (bf16)
    need += 2 * 512 * 128 * 4                # double-buffered w2^T (lane-padded)
    need += 2 * 8 * t * 4                    # double-buffered focal coefficients
    need += 2 * 512 * t * 4                  # h (f32) + one reduction temporary
    need += 24 * t * 4                       # small (2,T)/(1,T) focal temporaries
    need += 2 * 2 * 2 * t * out_itemsize     # double-buffered x_out + focal outputs
    return need


def _pick_hw_tile(hw, c, n, x_itemsize, out_itemsize, budget_bytes, num_cores,
                  max_tile=8192):
    """Largest spatial tile (multiple of 128, or full H*W) within the budget."""
    def fits(t):
        return _vmem_need(t, c, x_itemsize, out_itemsize) <= budget_bytes

    if hw <= max_tile and fits(hw):
        t = hw
    else:
        t = min((max_tile // 128) * 128, max(128, (hw // 128) * 128))
        while t > 128 and not fits(t):
            t -= 128
        t = max(t, 128)

    # Only split a single-image full tile when the part has 2 TensorCores
    # (v7x-class); produce exactly 2 tiles for load balance.
    if n == 1 and num_cores >= 2 and t == hw and hw >= 256:
        t_half = (((hw + 1) // 2 + 127) // 128) * 128
        if t_half < hw and fits(t_half):
            t = t_half
    return t


# ---------------- wrapper ----------------

def init_params(dim, key):
    k1, k2, k3, k4 = jax.random.split(key, 4)
    return {
        # PyTorch Conv2d weight shapes: (out, in, 1, 1)
        "conv1_w": 0.01 * jax.random.normal(k1, (512, dim, 1, 1), jnp.float32),
        "conv2_w": 0.01 * jax.random.normal(k2, (2, 512, 1, 1), jnp.float32),
        # nn.Linear(2, 2): weight (out, in), bias (out,)
        "fc_w": 0.1 * jax.random.normal(k3, (2, 2), jnp.float32),
        "fc_b": 0.1 * jax.random.normal(k4, (2,), jnp.float32),
    }


def image_da_focal_forward(x_nchw, need_backprop, params, focal=None,
                           hw_tile=None, out_dtype=None):
    N, C, H, W = x_nchw.shape
    HW = H * W
    out_dt = jnp.dtype(out_dtype) if out_dtype is not None else x_nchw.dtype

    # grad_reverse is identity in the forward pass.
    x3 = x_nchw.reshape(N, C, HW)            # free contiguous reshape, stays NCHW
    # bf16 weights: halves weight DMA and lets the MXU run at bf16 rate; the
    # matmul still accumulates in f32.  (Shipping x itself in bf16 from the
    # producer would also halve the x HBM read; here x is cast in-kernel.)
    w1 = params["conv1_w"].reshape(512, C).astype(jnp.bfloat16)   # (512, C)
    w2t = params["conv2_w"].reshape(2, 512).T.astype(jnp.float32)  # (512, 2)

    cap = _tpu_vmem_capacity_bytes()
    num_cores = _tpu_num_cores_guess(cap)
    budget = min(cap // 2, 80 << 20)
    x_isz = jnp.dtype(x_nchw.dtype).itemsize
    o_isz = jnp.dtype(out_dt).itemsize
    if hw_tile is None:
        hw_tile = _pick_hw_tile(HW, C, N, x_isz, o_isz, budget, num_cores)
    grid = (N, pl.cdiv(HW, hw_tile))

    need = _vmem_need(hw_tile, C, x_isz, o_isz)
    vmem_limit = int(min(max(need + (16 << 20), 32 << 20), cap - (4 << 20), 100 << 20))

    x_spec = pl.BlockSpec((1, C, hw_tile), lambda n, j: (n, 0, j))
    w1_spec = pl.BlockSpec((512, C), lambda n, j: (0, 0))
    w2t_spec = pl.BlockSpec((512, 2), lambda n, j: (0, 0))
    o_spec = pl.BlockSpec((1, 2, hw_tile), lambda n, j: (n, 0, j))

    compiler_params = pltpu.CompilerParams(
        dimension_semantics=("parallel", "parallel"),
        vmem_limit_bytes=vmem_limit,
    )

    # Fused focal path needs H*W even so that .view(-1, 2) pairs never cross a
    # channel/image boundary (true for any practical feature map).
    fuse_focal = (focal is not None) and (HW % 2 == 0)

    if fuse_focal:
        assert hw_tile % 2 == 0, "fused focal path requires an even spatial tile"
        # Per-lane blend coefficients for the 2x2 focal linear.
        fcw = params["fc_w"].astype(jnp.float32)
        fcb = params["fc_b"].astype(jnp.float32)
        even = (jnp.arange(hw_tile) % 2) == 0
        coef = jnp.stack([
            jnp.where(even, fcw[0, 0], fcw[1, 1]),   # self weight
            jnp.where(even, fcw[0, 1], 0.0),         # next-lane weight (even lanes)
            jnp.where(even, 0.0, fcw[1, 0]),         # prev-lane weight (odd lanes)
            jnp.where(even, fcb[0], fcb[1]),         # bias
            even.astype(jnp.float32),                # parity mask
        ], axis=0)                                   # (5, hw_tile) f32
        coef_spec = pl.BlockSpec((5, hw_tile), lambda n, j: (0, 0))

        out3, focal3 = pl.pallas_call(
            _da_head_focal_kernel,
            grid=grid,
            in_specs=[x_spec, w1_spec, w2t_spec, coef_spec],
            out_specs=[o_spec, o_spec],
            out_shape=[
                jax.ShapeDtypeStruct((N, 2, HW), out_dt),
                jax.ShapeDtypeStruct((N, 2, HW), out_dt),
            ],
            compiler_params=compiler_params,
        )(x3, w1, w2t, coef)
    else:
        out3 = pl.pallas_call(
            _da_head_kernel,
            grid=grid,
            in_specs=[x_spec, w1_spec, w2t_spec],
            out_specs=o_spec,
            out_shape=jax.ShapeDtypeStruct((N, 2, HW), out_dt),
            compiler_params=compiler_params,
        )(x3, w1, w2t)
        focal3 = None

    x_out = out3.reshape(N, 2, H, W)          # free reshape, stays NCHW

    # ImageLabelResizeLayer: nearest-resize of the per-image scalar label to the
    # (H, W) feature map -> constant fill per image.
    # TODO(synk): PyTorch returns int64 labels; int32 here (JAX x64 disabled).
    label = jnp.broadcast_to(
        need_backprop.astype(jnp.int32).reshape(N, 1, 1), (N, H, W))

    if focal is None:
        return x_out, label

    if fuse_focal:
        focal_score = focal3.reshape(-1, 2)   # free reshape of (N, 2, HW)
    else:
        # Odd H*W corner case: pairs cross slice boundaries; tiny plain-JAX fc.
        focal_score = x_out.reshape(-1, 2) @ params["fc_w"].T + params["fc_b"]

    return x_out, label, focal_score


# ---------------- pure-JAX reference for sanity check ----------------

def _reference(x_nchw, need_backprop, params):
    N, C, H, W = x_nchw.shape
    w1 = params["conv1_w"].reshape(512, C)
    w2 = params["conv2_w"].reshape(2, 512)
    h = jnp.einsum("nchw,oc->nohw", x_nchw, w1)
    h = jnp.maximum(h, 0.0)
    x_out = jnp.einsum("nchw,oc->nohw", h, w2)
    label = jnp.broadcast_to(
        need_backprop.astype(jnp.int32).reshape(N, 1, 1), (N, H, W))
    focal_score = x_out.reshape(-1, 2) @ params["fc_w"].T + params["fc_b"]
    return x_out, label, focal_score


if __name__ == "__main__":
    key = jax.random.PRNGKey(0)
    k_x, k_p = jax.random.split(key)

    dim, N, H, W = 4, 2, 16, 16
    x = jax.random.normal(k_x, (N, dim, H, W), jnp.float32)
    need_backprop = jnp.array([1.0, 0.0], jnp.float32)
    params = init_params(dim, k_p)

    x_out, label, focal_score = image_da_focal_forward(
        x, need_backprop, params, focal=True)
    jax.block_until_ready((x_out, label, focal_score))

    x_ref, label_ref, focal_ref = _reference(x, need_backprop, params)
    assert x_out.shape == (N, 2, H, W)
    assert label.shape == (N, H, W)
    assert focal_score.shape == (N * 2 * H * W // 2, 2)
    # bf16 MXU operands (f32 accumulate) -> relaxed tolerances vs the f32 reference.
    assert jnp.allclose(x_out, x_ref, atol=1e-3, rtol=5e-2)
    assert jnp.array_equal(label, label_ref)
    assert jnp.allclose(focal_score, focal_ref, atol=1e-3, rtol=5e-2)

    # also exercise the focal=None path
    x_out2, label2 = image_da_focal_forward(x, need_backprop, params)
    jax.block_until_ready((x_out2, label2))
    assert jnp.allclose(x_out2, x_ref, atol=1e-3, rtol=5e-2)
    assert jnp.array_equal(label2, label_ref)

    print("KERNEL_OK")
</pallas_src>

<mosaic_0001>
module attributes {stable_mosaic.version = 11 : i64} {
  func.func @_da_head_focal_kernel(%arg0: i32, %arg1: i32, %arg2: memref<1x4x256xf32, #tpu.memory_space<vmem>>, %arg3: memref<512x4xbf16, #tpu.memory_space<vmem>>, %arg4: memref<512x2xf32, #tpu.memory_space<vmem>>, %arg5: memref<5x256xf32, #tpu.memory_space<vmem>>, %arg6: memref<1x2x256xf32, #tpu.memory_space<vmem>>, %arg7: memref<1x2x256xf32, #tpu.memory_space<vmem>>) attributes {dimension_semantics = [#tpu.dimension_semantics<parallel>, #tpu.dimension_semantics<parallel>], iteration_bounds = array<i64: 2, 1>, scalar_prefetch = 0 : i64, scratch_operands = 0 : i64, tpu.core_type = #tpu.core_type<tc>, window_params = [{transform_indices = @transform_0, window_bounds = array<i64: 1, 4, 256>}, {pipeline_mode = #tpu.pipeline_mode<synchronous>, transform_indices = @transform_1, window_bounds = array<i64: 512, 4>}, {pipeline_mode = #tpu.pipeline_mode<synchronous>, transform_indices = @transform_2, window_bounds = array<i64: 512, 2>}, {pipeline_mode = #tpu.pipeline_mode<synchronous>, transform_indices = @transform_3, window_bounds = array<i64: 5, 256>}, {transform_indices = @transform_4, window_bounds = array<i64: 1, 2, 256>}, {transform_indices = @transform_5, window_bounds = array<i64: 1, 2, 256>}]} {
    %c0 = arith.constant 0 : index
    %c0_0 = arith.constant 0 : index
    %c0_1 = arith.constant 0 : index
    %0 = vector.load %arg2[%c0, %c0_0, %c0_1] : memref<1x4x256xf32, #tpu.memory_space<vmem>>, vector<1x4x256xf32>
    %1 = vector.shape_cast %0 : vector<1x4x256xf32> to vector<4x256xf32>
    %2 = arith.truncf %1 : vector<4x256xf32> to vector<4x256xbf16>
    %c0_2 = arith.constant 0 : index
    %c0_3 = arith.constant 0 : index
    %3 = vector.load %arg3[%c0_2, %c0_3] : memref<512x4xbf16, #tpu.memory_space<vmem>>, vector<512x4xbf16>
    %cst = arith.constant dense<0.000000e+00> : vector<512x256xf32>
    %4 = tpu.matmul %3, %2, %cst {dimension_numbers = #tpu.dot_dimension_numbers<[1], [0], [0], [1], [0, 0, 1, 1], [], []>} : vector<512x4xbf16>, vector<4x256xbf16>, vector<512x256xf32> -> vector<512x256xf32>
    %cst_4 = arith.constant 0.000000e+00 : f32
    %5 = vector.broadcast %cst_4 : f32 to vector<512x256xf32>
    %6 = arith.maximumf %4, %5 : vector<512x256xf32>
    %c0_5 = arith.constant 0 : index
    %c0_6 = arith.constant 0 : index
    %7 = vector.load %arg4[%c0_5, %c0_6] : memref<512x2xf32, #tpu.memory_space<vmem>>, vector<512x2xf32>
    %8 = vector.extract_strided_slice %7 {offsets = [0, 0], sizes = [512, 1], strides = [1, 1]} : vector<512x2xf32> to vector<512x1xf32>
    %9 = vector.broadcast %8 : vector<512x1xf32> to vector<512x256xf32>
    %10 = arith.mulf %9, %6 : vector<512x256xf32>
    %cst_7 = arith.constant dense<0.000000e+00> : vector<256xf32>
    %11 = vector.multi_reduction <add>, %10, %cst_7 [0] : vector<512x256xf32> to vector<256xf32>
    %12 = vector.shape_cast %11 : vector<256xf32> to vector<1x256xf32>
    %13 = vector.extract_strided_slice %7 {offsets = [0, 1], sizes = [512, 1], strides = [1, 1]} : vector<512x2xf32> to vector<512x1xf32>
    %14 = vector.broadcast %13 : vector<512x1xf32> to vector<512x256xf32>
    %15 = arith.mulf %14, %6 : vector<512x256xf32>
    %cst_8 = arith.constant dense<0.000000e+00> : vector<256xf32>
    %16 = vector.multi_reduction <add>, %15, %cst_8 [0] : vector<512x256xf32> to vector<256xf32>
    %17 = vector.shape_cast %16 : vector<256xf32> to vector<1x256xf32>
    %18 = tpu.concatenate %12, %17 in 0 : vector<1x256xf32>, vector<1x256xf32> -> vector<2x256xf32>
    %c0_9 = arith.constant 0 : index
    %c0_10 = arith.constant 0 : index
    %c0_11 = arith.constant 0 : index
    %19 = vector.load %arg6[%c0_9, %c0_10, %c0_11] : memref<1x2x256xf32, #tpu.memory_space<vmem>>, vector<1x2x256xf32>
    %20 = vector.shape_cast %19 : vector<1x2x256xf32> to vector<2x256xf32>
    %21 = vector.shape_cast %18 : vector<2x256xf32> to vector<1x2x256xf32>
    tpu.vector_store %arg6[%c0_9, %c0_10, %c0_11], %21 {strides = array<i32>} : memref<1x2x256xf32, #tpu.memory_space<vmem>>, vector<1x2x256xf32>,
    %c0_12 = arith.constant 0 : index
    %c0_13 = arith.constant 0 : index
    %22 = vector.load %arg5[%c0_12, %c0_13] : memref<5x256xf32, #tpu.memory_space<vmem>>, vector<5x256xf32>
    %c1_i32 = arith.constant 1 : i32
    %23 = tpu.dynamic_rotate %18 by %c1_i32 dim 1 : vector<2x256xf32>, i32 -> vector<2x256xf32>
    %c255_i32 = arith.constant 255 : i32
    %24 = tpu.dynamic_rotate %18 by %c255_i32 dim 1 : vector<2x256xf32>, i32 -> vector<2x256xf32>
    %25 = vector.extract_strided_slice %22 {offsets = [4, 0], sizes = [1, 256], strides = [1, 1]} : vector<5x256xf32> to vector<1x256xf32>
    %cst_14 = arith.constant 5.000000e-01 : f32
    %26 = vector.broadcast %cst_14 : f32 to vector<1x256xf32>
    %27 = arith.cmpf ogt, %25, %26 : vector<1x256xf32>
    %28 = vector.extract_strided_slice %22 {offsets = [1, 0], sizes = [1, 256], strides = [1, 1]} : vector<5x256xf32> to vector<1x256xf32>
    %29 = vector.broadcast %28 : vector<1x256xf32> to vector<2x256xf32>
    %30 = arith.mulf %29, %24 : vector<2x256xf32>
    %31 = vector.extract_strided_slice %22 {offsets = [2, 0], sizes = [1, 256], strides = [1, 1]} : vector<5x256xf32> to vector<1x256xf32>
    %32 = vector.broadcast %31 : vector<1x256xf32> to vector<2x256xf32>
    %33 = arith.mulf %32, %23 : vector<2x256xf32>
    %34 = vector.shape_cast %27 : vector<1x256xi1> to vector<1x256xi1>
    %35 = vector.broadcast %34 : vector<1x256xi1> to vector<2x256xi1>
    %36 = arith.select %35, %30, %33 : vector<2x256xi1>, vector<2x256xf32>
    %37 = vector.extract_strided_slice %22 {offsets = [0, 0], sizes = [1, 256], strides = [1, 1]} : vector<5x256xf32> to vector<1x256xf32>
    %38 = vector.broadcast %37 : vector<1x256xf32> to vector<2x256xf32>
    %39 = arith.mulf %18, %38 : vector<2x256xf32>
    %40 = arith.addf %39, %36 : vector<2x256xf32>
    %41 = vector.extract_strided_slice %22 {offsets = [3, 0], sizes = [1, 256], strides = [1, 1]} : vector<5x256xf32> to vector<1x256xf32>
    %42 = vector.broadcast %41 : vector<1x256xf32> to vector<2x256xf32>
    %43 = arith.addf %40, %42 : vector<2x256xf32>
    %c0_15 = arith.constant 0 : index
    %c0_16 = arith.constant 0 : index
    %c0_17 = arith.constant 0 : index
    %44 = vector.load %arg7[%c0_15, %c0_16, %c0_17] : memref<1x2x256xf32, #tpu.memory_space<vmem>>, vector<1x2x256xf32>
    %45 = vector.shape_cast %44 : vector<1x2x256xf32> to vector<2x256xf32>
    %46 = vector.shape_cast %43 : vector<2x256xf32> to vector<1x2x256xf32>
    tpu.vector_store %arg7[%c0_15, %c0_16, %c0_17], %46 {strides = array<i32>} : memref<1x2x256xf32, #tpu.memory_space<vmem>>, vector<1x2x256xf32>,
    return
  }
  func.func @transform_0(%arg0: i32, %arg1: i32) -> (i32, i32, i32) {
    %c0_i32 = arith.constant 0 : i32
    %c0_i32_0 = arith.constant 0 : i32
    return %arg0, %c0_i32, %arg1 : i32, i32, i32
  }
  func.func @transform_1(%arg0: i32, %arg1: i32) -> (i32, i32) {
    %c0_i32 = arith.constant 0 : i32
    %c0_i32_0 = arith.constant 0 : i32
    %c0_i32_1 = arith.constant 0 : i32
    return %c0_i32, %c0_i32_0 : i32, i32
  }
  func.func @transform_2(%arg0: i32, %arg1: i32) -> (i32, i32) {
    %c0_i32 = arith.constant 0 : i32
    %c0_i32_0 = arith.constant 0 : i32
    %c0_i32_1 = arith.constant 0 : i32
    return %c0_i32, %c0_i32_0 : i32, i32
  }
  func.func @transform_3(%arg0: i32, %arg1: i32) -> (i32, i32) {
    %c0_i32 = arith.constant 0 : i32
    %c0_i32_0 = arith.constant 0 : i32
    %c0_i32_1 = arith.constant 0 : i32
    return %c0_i32, %c0_i32_0 : i32, i32
  }
  func.func @transform_4(%arg0: i32, %arg1: i32) -> (i32, i32, i32) {
    %c0_i32 = arith.constant 0 : i32
    %c0_i32_0 = arith.constant 0 : i32
    return %arg0, %c0_i32, %arg1 : i32, i32, i32
  }
  func.func @transform_5(%arg0: i32, %arg1: i32) -> (i32, i32, i32) {
    %c0_i32 = arith.constant 0 : i32
    %c0_i32_0 = arith.constant 0 : i32
    return %arg0, %c0_i32, %arg1 : i32, i32, i32
  }
}

</mosaic_0001>

<llo_original>
// kernel: tpu_custom_call.1
$region0: #{tpu_custom_call.1}
  #allocation0 [shape = 'u32[]', space=smem, size = 0x4, offset = 0x4, fixed_abs, tag = 'smem constant byte address 0x4 - core index']
  #allocation1 [shape = 'u32[144,128]{1,0:T(1,128)}', space=vmem, size = 0x12000, scoped, tag = 'internal scratch']
  %s0 = inlined_call_operand.vmem [shape: f32[2,4,256], index: 0, kind: input, shape index: {}]
  %s1 = inlined_call_operand.vmem [shape: bf16[512,4], index: 1, kind: input, shape index: {}]
  %s2 = inlined_call_operand.vmem [shape: f32[512,2], index: 2, kind: input, shape index: {}]
  %s3 = inlined_call_operand.vmem [shape: f32[5,256], index: 3, kind: input, shape index: {}]
  %s4 = inlined_call_operand.hbm [shape: f32[2,2,256], index: 4, kind: output, shape index: {0}]
  %s5 = inlined_call_operand.hbm [shape: f32[2,2,256], index: 5, kind: output, shape index: {1}]
  %6 = xla_tuple %s4, %s5
  %s7 = sld [smem:[#allocation0]]
  $region57: #{tpu_custom_call.1} parent=0
    _
  %s9 = ssub.s32 1, %s7
  %s10 = scalar_select 0, %s9, %s7
  $region1: #{tpu_custom_call.1} parent=0
    #allocation2 [shape = 'u8[4096]{0}', space=vmem, size = 0x1000, scoped, tag = 'output window, operand 0']
    #allocation3 [shape = 's32[2]{0}', space=sflag, size = 0x8, scoped, tag = 'scoped memory for tpu_custom_call.1']
    #allocation4 [shape = 'u8[4096]{0}', space=vmem, size = 0x1000, scoped, tag = 'output window, operand 1']
    #allocation5 [shape = 's32[2]{0}', space=sflag, size = 0x8, scoped, tag = 'scoped memory for tpu_custom_call.1']
    %11 = vsyncpa [#allocation3], 0
    %s12 = scalar_lea.sflag [#allocation3], 1
    %13 = vsyncpa %s12, 0
    %14 = vsyncpa [#allocation5], 0
    %s15 = scalar_lea.sflag [#allocation5], 1
    %16 = vsyncpa %s15, 0
    loop: start=0, step=1, limit=4
    $region2: #{tpu_custom_call.1} parent=1 // loop_pre_header
      _
    $region3: #{tpu_custom_call.1} parent=1 // loop_header
      %s18 = sphi 0, %s22
      %p19 = scmp.ge.s32.totalorder %s18, 4
      %s25 = sphi 0, %s37
      %s26 = sphi 0, %s33
      %s27 = sphi 0, %s25
      %s28 = sphi 0, %s26
      %s29 = sphi 0, %s27
      %s30 = sphi 0, %s28
      %s42 = sphi 0, %s44
      %s45 = sphi 0, %s42
      %s46 = sphi 0, %s45
      %s62 = sphi 0, %s46
      %s66 = sphi 0, %s66
      %s68 = sphi 0, %s66
      %s69 = sphi 0, %s68
      %s83 = sphi 0, %s69
      %s87 = sphi 0, %s87
      %s89 = sphi 0, %s87
      %s90 = sphi 0, %s89
      %s104 = sphi 0, %s90
      %s108 = sphi 0, %s108
      %s110 = sphi 0, %s108
      %s111 = sphi 0, %s110
      %s125 = sphi 0, %s111
      %s133 = sphi 0, %s135
      %s136 = sphi 0, %s133
      %s137 = sphi 0, %s136
      %s153 = sphi 0, %s137
      %s161 = sphi 0, %s163
      %s164 = sphi 0, %s161
      %s165 = sphi 0, %s164
      %s181 = sphi 0, %s165
    $region4: #{tpu_custom_call.1} parent=1 // loop_header_branch
      %21 = sbr.rel (%p19) target = $region8
    $region5: #{tpu_custom_call.1} parent=1 // loop_body
      %s23 = ssub.s32 %s18, 1
      %s24 = ssub.s32 %s18, 2
      %s31 = sadd.s32 1, %s26
      %p32 = scmp.ge.s32.totalorder %s31, 1
      %s33 = scalar_select %p32, 0, %s31
      %s34 = sadd.s32 1, %s25
      %s35 = scalar_select %p32, %s34, %s25
      %p36 = scmp.ge.s32.totalorder %s35, 2
      %s37 = scalar_select %p36, 0, %s35
      %s38 = ssub.s32 %s25, %s37
      %s39 = ssub.s32 %s26, %s33
      %s40 = sor.u32 %s38, %s39
      %p41 = scmp.eq.s32.totalorder %s40, 0
      %s43 = sadd.s32 %s42, 1
      %s44 = scalar_select %p41, %s42, %s43
      %p47 = pneg %p41
      %p48 = scmp.eq.s32.totalorder %s18, 1
      %p49 = por %p47, %p48
      %p50 = scmp.ne.s32.totalorder %s42, %s45
      %p51 = scmp.eq.s32.totalorder %s18, 0
      %p52 = por %p50, %p51
      %p53 = scmp.ne.s32.totalorder %s42, %s45
      %p54 = scmp.eq.s32.totalorder %s23, 1
      %p55 = por %p53, %p54
      %p56 = scmp.ne.s32.totalorder %s45, %s46
      %p57 = scmp.eq.s32.totalorder %s23, 0
      %p58 = por %p56, %p57
      %p59 = scmp.ne.s32.totalorder %s45, %s46
      %p60 = scmp.eq.s32.totalorder %s24, 1
      %p61 = por %p59, %p60
      %p63 = scmp.ne.s32.totalorder %s46, %s62
      %p64 = scmp.eq.s32.totalorder %s24, 0
      %p65 = por %p63, %p64
      %s67 = sadd.s32 %s66, 1
      %p70 = scmp.eq.s32.totalorder %s18, 1
      %p71 = scmp.ne.s32.totalorder %s66, %s68
      %p72 = scmp.eq.s32.totalorder %s18, 0
      %p73 = por %p71, %p72
      %p74 = scmp.ne.s32.totalorder %s66, %s68
      %p75 = scmp.eq.s32.totalorder %s23, 1
      %p76 = por %p74, %p75
      %p77 = scmp.ne.s32.totalorder %s68, %s69
      %p78 = scmp.eq.s32.totalorder %s23, 0
      %p79 = por %p77, %p78
      %p80 = scmp.ne.s32.totalorder %s68, %s69
      %p81 = scmp.eq.s32.totalorder %s24, 1
      %p82 = por %p80, %p81
      %p84 = scmp.ne.s32.totalorder %s69, %s83
      %p85 = scmp.eq.s32.totalorder %s24, 0
      %p86 = por %p84, %p85
      %s88 = sadd.s32 %s87, 1
      %p91 = scmp.eq.s32.totalorder %s18, 1
      %p92 = scmp.ne.s32.totalorder %s87, %s89
      %p93 = scmp.eq.s32.totalorder %s18, 0
      %p94 = por %p92, %p93
      %p95 = scmp.ne.s32.totalorder %s87, %s89
      %p96 = scmp.eq.s32.totalorder %s23, 1
      %p97 = por %p95, %p96
      %p98 = scmp.ne.s32.totalorder %s89, %s90
      %p99 = scmp.eq.s32.totalorder %s23, 0
      %p100 = por %p98, %p99
      %p101 = scmp.ne.s32.totalorder %s89, %s90
      %p102 = scmp.eq.s32.totalorder %s24, 1
      %p103 = por %p101, %p102
      %p105 = scmp.ne.s32.totalorder %s90, %s104
      %p106 = scmp.eq.s32.totalorder %s24, 0
      %p107 = por %p105, %p106
      %s109 = sadd.s32 %s108, 1
      %p112 = scmp.eq.s32.totalorder %s18, 1
      %p113 = scmp.ne.s32.totalorder %s108, %s110
      %p114 = scmp.eq.s32.totalorder %s18, 0
      %p115 = por %p113, %p114
      %p116 = scmp.ne.s32.totalorder %s108, %s110
      %p117 = scmp.eq.s32.totalorder %s23, 1
      %p118 = por %p116, %p117
      %p119 = scmp.ne.s32.totalorder %s110, %s111
      %p120 = scmp.eq.s32.totalorder %s23, 0
      %p121 = por %p119, %p120
      %p122 = scmp.ne.s32.totalorder %s110, %s111
      %p123 = scmp.eq.s32.totalorder %s24, 1
      %p124 = por %p122, %p123
      %p126 = scmp.ne.s32.totalorder %s111, %s125
      %p127 = scmp.eq.s32.totalorder %s24, 0
      %p128 = por %p126, %p127
      %s129 = ssub.s32 %s25, %s37
      %s130 = ssub.s32 %s26, %s33
      %s131 = sor.u32 %s129, %s130
      %p132 = scmp.eq.s32.totalorder %s131, 0
      %s134 = sadd.s32 %s133, 1
      %s135 = scalar_select %p132, %s133, %s134
      %p138 = pneg %p132
      %p139 = scmp.eq.s32.totalorder %s18, 1
      %p140 = por %p138, %p139
      %p141 = scmp.ne.s32.totalorder %s133, %s136
      %p142 = scmp.eq.s32.totalorder %s18, 0
      %p143 = por %p141, %p142
      %p144 = scmp.ne.s32.totalorder %s133, %s136
      %p145 = scmp.eq.s32.totalorder %s23, 1
      %p146 = por %p144, %p145
      %p147 = scmp.ne.s32.totalorder %s136, %s137
      %p148 = scmp.eq.s32.totalorder %s23, 0
      %p149 = por %p147, %p148
      %p150 = scmp.ne.s32.totalorder %s136, %s137
      %p151 = scmp.eq.s32.totalorder %s24, 1
      %p152 = por %p150, %p151
      %p154 = scmp.ne.s32.totalorder %s137, %s153
      %p155 = scmp.eq.s32.totalorder %s24, 0
      %p156 = por %p154, %p155
      %s157 = ssub.s32 %s25, %s37
      %s158 = ssub.s32 %s26, %s33
      %s159 = sor.u32 %s157, %s158
      %p160 = scmp.eq.s32.totalorder %s159, 0
      %s162 = sadd.s32 %s161, 1
      %s163 = scalar_select %p160, %s161, %s162
      %p166 = pneg %p160
      %p167 = scmp.eq.s32.totalorder %s18, 1
      %p168 = por %p166, %p167
      %p169 = scmp.ne.s32.totalorder %s161, %s164
      %p170 = scmp.eq.s32.totalorder %s18, 0
      %p171 = por %p169, %p170
      %p172 = scmp.ne.s32.totalorder %s161, %s164
      %p173 = scmp.eq.s32.totalorder %s23, 1
      %p174 = por %p172, %p173
      %p175 = scmp.ne.s32.totalorder %s164, %s165
      %p176 = scmp.eq.s32.totalorder %s23, 0
      %p177 = por %p175, %p176
      %p178 = scmp.ne.s32.totalorder %s164, %s165
      %p179 = scmp.eq.s32.totalorder %s24, 1
      %p180 = por %p178, %p179
      %p182 = scmp.ne.s32.totalorder %s165, %s181
      %p183 = scmp.eq.s32.totalorder %s24, 0
      %p184 = por %p182, %p183
      %p185 = scmp.le.s32.totalorder 1, %s18
      %p186 = scmp.lt.s32.totalorder %s18, 3
      %p187 = pnand %p185, %p186
      %p188 = pneg %p187
      // Predicated region
      $region9: #{tpu_custom_call.1} parent=5 // pred_check
        _
      $region10: #{tpu_custom_call.1} parent=5 // pred_check_branch
        %190 = sbr.rel (%p187) target = $region12
      $region11: #{tpu_custom_call.1} parent=5 // pred_region
        %s191 = ssub.s32 %s18, 1
        // Predicated region
        $region13: #{tpu_custom_call.1} parent=11 // pred_check
          %p192 = pneg %p79
        $region14: #{tpu_custom_call.1} parent=11 // pred_check_branch
          %194 = sbr.rel (%p192) target = $region16
        $region15: #{tpu_custom_call.1} parent=11 // pred_region
          _
        $region16: #{tpu_custom_call.1} parent=11 // pred_fallthru
          _
        // Predicated region
        $region17: #{tpu_custom_call.1} parent=11 // pred_check
          %p195 = pneg %p100
        $region18: #{tpu_custom_call.1} parent=11 // pred_check_branch
          %197 = sbr.rel (%p195) target = $region20
        $region19: #{tpu_custom_call.1} parent=11 // pred_region
          _
        $region20: #{tpu_custom_call.1} parent=11 // pred_fallthru
          _
        // Predicated region
        $region21: #{tpu_custom_call.1} parent=11 // pred_check
          %p198 = pneg %p121
        $region22: #{tpu_custom_call.1} parent=11 // pred_check_branch
          %200 = sbr.rel (%p198) target = $region24
        $region23: #{tpu_custom_call.1} parent=11 // pred_region
          _
        $region24: #{tpu_custom_call.1} parent=11 // pred_fallthru
          _
      $region12: #{tpu_custom_call.1} parent=5 // pred_fallthru
        _
      %p201 = scmp.lt.s32.totalorder %s18, 2
      // Predicated region
      $region25: #{tpu_custom_call.1} parent=5 // pred_check
        %p202 = pneg %p201
      $region26: #{tpu_custom_call.1} parent=5 // pred_check_branch
        %204 = sbr.rel (%p202) target = $region28
      $region27: #{tpu_custom_call.1} parent=5 // pred_region
        // Predicated region
        $region29: #{tpu_custom_call.1} parent=27 // pred_check
          %p205 = pneg %p52
        $region30: #{tpu_custom_call.1} parent=27 // pred_check_branch
          %207 = sbr.rel (%p205) target = $region32
        $region31: #{tpu_custom_call.1} parent=27 // pred_region
          %s208 = smul.u32 2, %s26
          %p209 = scmp.lt.s32.totalorder %s25, 1
          %s210 = scalar_select %p209, %s25, 1
          %p211 = scmp.lt.s32.totalorder %s208, 1
          %s212 = scalar_select %p211, %s208, 1
          %s213 = smul.addr %s210, 2
          %s214 = sadd.s32 %s212, %s213
          %s215 = smul.addr %s214, 4
          %s216 = scalar_lea.vmem %s0, %s215
          %s217 = smul.u32 2, %s26
        $region32: #{tpu_custom_call.1} parent=27 // pred_fallthru
          _
      $region28: #{tpu_custom_call.1} parent=5 // pred_fallthru
        _
      %p218 = scmp.le.s32.totalorder 1, %s18
      %p219 = scmp.lt.s32.totalorder %s18, 3
      %p220 = pnand %p218, %p219
      %p221 = pneg %p220
      // Predicated region
      $region33: #{tpu_custom_call.1} parent=5 // pred_check
        _
      $region34: #{tpu_custom_call.1} parent=5 // pred_check_branch
        %223 = sbr.rel (%p220) target = $region36
      $region35: #{tpu_custom_call.1} parent=5 // pred_region
        %s224 = ssub.s32 %s18, 1
        %s225 = smul.u32 2, %s28
        %p226 = scmp.lt.s32.totalorder %s27, 1
        %s227 = scalar_select %p226, %s27, 1
        %p228 = scmp.lt.s32.totalorder %s225, 1
        %s229 = scalar_select %p228, %s225, 1
        %s230 = smul.addr %s227, 2
        %s231 = sadd.s32 %s229, %s230
        %s232 = smul.addr %s231, 4
        %s233 = scalar_lea.vmem %s0, %s232
        %p234 = pneg %p58
        %p235 = pneg %p55
        %p236 = pneg %p79
        %p237 = pneg %p76
        %p238 = pneg %p100
        %p239 = pneg %p97
        %p240 = pneg %p121
        %p241 = pneg %p118
        %p242 = pneg %p149
        %p243 = pneg %p146
        %s244 = sand.u32 %s136, 1
        %s245 = scalar_lea.sflag [#allocation3], %s244
        %s246 = sand.u32 %s136, 1
        %s247 = smul.addr %s246, 4
        %s248 = scalar_lea.vmem [#allocation2], %s247
        %p249 = pneg %p177
        %p250 = pneg %p174
        %s251 = sand.u32 %s164, 1
        %s252 = scalar_lea.sflag [#allocation5], %s251
        %s253 = sand.u32 %s164, 1
        %s254 = smul.addr %s253, 4
        %s255 = scalar_lea.vmem [#allocation4], %s254
        %s256 = smul.u32 2, %s28
        %p257 = scmp.lt.s32.totalorder %s27, 1
        %s258 = scalar_select %p257, %s27, 1
        %p259 = scmp.lt.s32.totalorder %s256, 1
        %s260 = scalar_select %p259, %s256, 1
        %s261 = smul.addr %s258, 2
        %s262 = sadd.s32 %s260, %s261
        %s263 = smul.addr %s262, 4
        %s264 = scalar_lea.vmem %s0, %s263
        %s265 = smul.u32 2, %s28
        %s266 = smul.u32 2, %s28
        %s267 = smul.u32 2, %s28
        %v269 = vld [vmem:[%s264] sm:$0xff]
        %v271 = vcombine.high %v269, %v269
        %v273 = vpack.c.bf16 %v269, %v269
        %v274 = vpack.c.bf16 %v271, %v271
        %v275 = vld [vmem:[%s1] sm:$0xf]
        %v276 = vld [vmem:[%s1 + $0x4] sm:$0xf]
        %v277 = vld [vmem:[%s1 + $0x8] sm:$0xf]
        %v278 = vld [vmem:[%s1 + $0xc] sm:$0xf]
        %v279 = vld [vmem:[%s1 + $0x10] sm:$0xf]
        %v280 = vld [vmem:[%s1 + $0x14] sm:$0xf]
        %v281 = vld [vmem:[%s1 + $0x18] sm:$0xf]
        %v282 = vld [vmem:[%s1 + $0x1c] sm:$0xf]
        %v283 = vld [vmem:[%s1 + $0x20] sm:$0xf]
        %v284 = vld [vmem:[%s1 + $0x24] sm:$0xf]
        %v285 = vld [vmem:[%s1 + $0x28] sm:$0xf]
        %v286 = vld [vmem:[%s1 + $0x2c] sm:$0xf]
        %v287 = vld [vmem:[%s1 + $0x30] sm:$0xf]
        %v288 = vld [vmem:[%s1 + $0x34] sm:$0xf]
        %v289 = vld [vmem:[%s1 + $0x38] sm:$0xf]
        %v290 = vld [vmem:[%s1 + $0x3c] sm:$0xf]
        %v291 = vld [vmem:[%s1 + $0x40] sm:$0xf]
        %v292 = vld [vmem:[%s1 + $0x44] sm:$0xf]
        %v293 = vld [vmem:[%s1 + $0x48] sm:$0xf]
        %v294 = vld [vmem:[%s1 + $0x4c] sm:$0xf]
        %v295 = vld [vmem:[%s1 + $0x50] sm:$0xf]
        %v296 = vld [vmem:[%s1 + $0x54] sm:$0xf]
        %v297 = vld [vmem:[%s1 + $0x58] sm:$0xf]
        %v298 = vld [vmem:[%s1 + $0x5c] sm:$0xf]
        %v299 = vld [vmem:[%s1 + $0x60] sm:$0xf]
        %v300 = vld [vmem:[%s1 + $0x64] sm:$0xf]
        %v301 = vld [vmem:[%s1 + $0x68] sm:$0xf]
        %v302 = vld [vmem:[%s1 + $0x6c] sm:$0xf]
        %v303 = vld [vmem:[%s1 + $0x70] sm:$0xf]
        %v304 = vld [vmem:[%s1 + $0x74] sm:$0xf]
        %v305 = vld [vmem:[%s1 + $0x78] sm:$0xf]
        %v306 = vld [vmem:[%s1 + $0x7c] sm:$0xf]
        %v307 = vld [vmem:[%s1 + $0x80] sm:$0xf]
        %v308 = vld [vmem:[%s1 + $0x84] sm:$0xf]
        %v309 = vld [vmem:[%s1 + $0x88] sm:$0xf]
        %v310 = vld [vmem:[%s1 + $0x8c] sm:$0xf]
        %v311 = vld [vmem:[%s1 + $0x90] sm:$0xf]
        %v312 = vld [vmem:[%s1 + $0x94] sm:$0xf]
        %v313 = vld [vmem:[%s1 + $0x98] sm:$0xf]
        %v314 = vld [vmem:[%s1 + $0x9c] sm:$0xf]
        %v315 = vld [vmem:[%s1 + $0xa0] sm:$0xf]
        %v316 = vld [vmem:[%s1 + $0xa4] sm:$0xf]
        %v317 = vld [vmem:[%s1 + $0xa8] sm:$0xf]
        %v318 = vld [vmem:[%s1 + $0xac] sm:$0xf]
        %v319 = vld [vmem:[%s1 + $0xb0] sm:$0xf]
        %v320 = vld [vmem:[%s1 + $0xb4] sm:$0xf]
        %v321 = vld [vmem:[%s1 + $0xb8] sm:$0xf]
        %v322 = vld [vmem:[%s1 + $0xbc] sm:$0xf]
        %v323 = vld [vmem:[%s1 + $0xc0] sm:$0xf]
        %v324 = vld [vmem:[%s1 + $0xc4] sm:$0xf]
        %v325 = vld [vmem:[%s1 + $0xc8] sm:$0xf]
        %v326 = vld [vmem:[%s1 + $0xcc] sm:$0xf]
        %v327 = vld [vmem:[%s1 + $0xd0] sm:$0xf]
        %v328 = vld [vmem:[%s1 + $0xd4] sm:$0xf]
        %v329 = vld [vmem:[%s1 + $0xd8] sm:$0xf]
        %v330 = vld [vmem:[%s1 + $0xdc] sm:$0xf]
        %v331 = vld [vmem:[%s1 + $0xe0] sm:$0xf]
        %v332 = vld [vmem:[%s1 + $0xe4] sm:$0xf]
        %v333 = vld [vmem:[%s1 + $0xe8] sm:$0xf]
        %v334 = vld [vmem:[%s1 + $0xec] sm:$0xf]
        %v335 = vld [vmem:[%s1 + $0xf0] sm:$0xf]
        %v336 = vld [vmem:[%s1 + $0xf4] sm:$0xf]
        %v337 = vld [vmem:[%s1 + $0xf8] sm:$0xf]
        %v338 = vld [vmem:[%s1 + $0xfc] sm:$0xf]
        %v403 = vunpack.c.l.b16 %v275
        %v404 = vunpack.c.l.b16 %v276
        %v405 = vunpack.c.l.b16 %v277
        %v406 = vunpack.c.l.b16 %v278
        %v407 = vunpack.c.l.b16 %v279
        %v408 = vunpack.c.l.b16 %v280
        %v409 = vunpack.c.l.b16 %v281
        %v410 = vunpack.c.l.b16 %v282
        %v411 = vunpack.c.l.b16 %v283
        %v412 = vunpack.c.l.b16 %v284
        %v413 = vunpack.c.l.b16 %v285
        %v414 = vunpack.c.l.b16 %v286
        %v415 = vunpack.c.l.b16 %v287
        %v416 = vunpack.c.l.b16 %v288
        %v417 = vunpack.c.l.b16 %v289
        %v418 = vunpack.c.l.b16 %v290
        %v419 = vunpack.c.l.b16 %v291
        %v420 = vunpack.c.l.b16 %v292
        %v421 = vunpack.c.l.b16 %v293
        %v422 = vunpack.c.l.b16 %v294
        %v423 = vunpack.c.l.b16 %v295
        %v424 = vunpack.c.l.b16 %v296
        %v425 = vunpack.c.l.b16 %v297
        %v426 = vunpack.c.l.b16 %v298
        %v427 = vunpack.c.l.b16 %v299
        %v428 = vunpack.c.l.b16 %v300
        %v429 = vunpack.c.l.b16 %v301
        %v430 = vunpack.c.l.b16 %v302
        %v431 = vunpack.c.l.b16 %v303
        %v432 = vunpack.c.l.b16 %v304
        %v433 = vunpack.c.l.b16 %v305
        %v434 = vunpack.c.l.b16 %v306
        %v435 = vunpack.c.l.b16 %v307
        %v436 = vunpack.c.l.b16 %v308
        %v437 = vunpack.c.l.b16 %v309
        %v438 = vunpack.c.l.b16 %v310
        %v439 = vunpack.c.l.b16 %v311
        %v440 = vunpack.c.l.b16 %v312
        %v441 = vunpack.c.l.b16 %v313
        %v442 = vunpack.c.l.b16 %v314
        %v443 = vunpack.c.l.b16 %v315
        %v444 = vunpack.c.l.b16 %v316
        %v445 = vunpack.c.l.b16 %v317
        %v446 = vunpack.c.l.b16 %v318
        %v447 = vunpack.c.l.b16 %v319
        %v448 = vunpack.c.l.b16 %v320
        %v449 = vunpack.c.l.b16 %v321
        %v450 = vunpack.c.l.b16 %v322
        %v451 = vunpack.c.l.b16 %v323
        %v452 = vunpack.c.l.b16 %v324
        %v453 = vunpack.c.l.b16 %v325
        %v454 = vunpack.c.l.b16 %v326
        %v455 = vunpack.c.l.b16 %v327
        %v456 = vunpack.c.l.b16 %v328
        %v457 = vunpack.c.l.b16 %v329
        %v458 = vunpack.c.l.b16 %v330
        %v459 = vunpack.c.l.b16 %v331
        %v460 = vunpack.c.l.b16 %v332
        %v461 = vunpack.c.l.b16 %v333
        %v462 = vunpack.c.l.b16 %v334
        %v463 = vunpack.c.l.b16 %v335
        %v464 = vunpack.c.l.b16 %v336
        %v465 = vunpack.c.l.b16 %v337
        %v466 = vunpack.c.l.b16 %v338
        %v467 = vpack.c.b16 %v404, %v403
        %v468 = vpack.c.b16 %v406, %v405
        %v469 = vpack.c.b16 %v408, %v407
        %v470 = vpack.c.b16 %v410, %v409
        %v471 = vpack.c.b16 %v412, %v411
        %v472 = vpack.c.b16 %v414, %v413
        %v473 = vpack.c.b16 %v416, %v415
        %v474 = vpack.c.b16 %v418, %v417
        %v475 = vpack.c.b16 %v420, %v419
        %v476 = vpack.c.b16 %v422, %v421
        %v477 = vpack.c.b16 %v424, %v423
        %v478 = vpack.c.b16 %v426, %v425
        %v479 = vpack.c.b16 %v428, %v427
        %v480 = vpack.c.b16 %v430, %v429
        %v481 = vpack.c.b16 %v432, %v431
        %v482 = vpack.c.b16 %v434, %v433
        %v483 = vpack.c.b16 %v436, %v435
        %v484 = vpack.c.b16 %v438, %v437
        %v485 = vpack.c.b16 %v440, %v439
        %v486 = vpack.c.b16 %v442, %v441
        %v487 = vpack.c.b16 %v444, %v443
        %v488 = vpack.c.b16 %v446, %v445
        %v489 = vpack.c.b16 %v448, %v447
        %v490 = vpack.c.b16 %v450, %v449
        %v491 = vpack.c.b16 %v452, %v451
        %v492 = vpack.c.b16 %v454, %v453
        %v493 = vpack.c.b16 %v456, %v455
        %v494 = vpack.c.b16 %v458, %v457
        %v495 = vpack.c.b16 %v460, %v459
        %v496 = vpack.c.b16 %v462, %v461
        %v497 = vpack.c.b16 %v464, %v463
        %v498 = vpack.c.b16 %v466, %v465
        %vm499 = vcmask 31744
        %v501 = vsel %vm499, %v467, 0
        %v504 = vsel %vm499, %v468, 0
        %v507 = vsel %vm499, %v469, 0
        %v510 = vsel %vm499, %v470, 0
        %v513 = vsel %vm499, %v471, 0
        %v516 = vsel %vm499, %v472, 0
        %v519 = vsel %vm499, %v473, 0
        %v522 = vsel %vm499, %v474, 0
        %v525 = vsel %vm499, %v475, 0
        %v528 = vsel %vm499, %v476, 0
        %v531 = vsel %vm499, %v477, 0
        %v534 = vsel %vm499, %v478, 0
        %v537 = vsel %vm499, %v479, 0
        %v540 = vsel %vm499, %v480, 0
        %v543 = vsel %vm499, %v481, 0
        %v546 = vsel %vm499, %v482, 0
        %v549 = vsel %vm499, %v483, 0
        %v552 = vsel %vm499, %v484, 0
        %v555 = vsel %vm499, %v485, 0
        %v558 = vsel %vm499, %v486, 0
        %v561 = vsel %vm499, %v487, 0
        %v564 = vsel %vm499, %v488, 0
        %v567 = vsel %vm499, %v489, 0
        %v570 = vsel %vm499, %v490, 0
        %v573 = vsel %vm499, %v491, 0
        %v576 = vsel %vm499, %v492, 0
        %v579 = vsel %vm499, %v493, 0
        %v582 = vsel %vm499, %v494, 0
        %v585 = vsel %vm499, %v495, 0
        %v588 = vsel %vm499, %v496, 0
        %v591 = vsel %vm499, %v497, 0
        %v594 = vsel %vm499, %v498, 0
        %vm596 = vcmask 1041408
        %v598 = vsel %vm596, %v273, 0
        %v601 = vsel %vm596, %v274, 0
        %603 = vmatprep.subr.bf16.mxu0 %v601
        %604 = vmatpush1.bf16.msra.mxu0 %v598
        %605 = vmatprep.subr.bf16.mxu0 0
        %606 = vmatpush1.bf16.msra.mxu0 0
        %607 = vmatprep.subr.bf16.mxu0 0
        %608 = vmatpush1.bf16.msra.mxu0 0
        %609 = vmatprep.subr.bf16.mxu0 0
        %610 = vmatpush1.bf16.msra.mxu0 0
        %611 = vmatprep.subr.bf16.mxu0 0
        %612 = vmatpush1.bf16.msra.mxu0 0
        %613 = vmatprep.subr.bf16.mxu0 0
        %614 = vmatpush1.bf16.msra.mxu0 0
        %615 = vmatprep.subr.bf16.mxu0 0
        %616 = vmatpush1.bf16.msra.mxu0 0
        %617 = vmatprep.subr.bf16.mxu0 0
        %618 = vmatpush1.bf16.msra.mxu0 0
        %619 = vmatprep.subr.bf16.mxu0 0
        %620 = vmatpush1.bf16.msra.mxu0 0
        %621 = vmatprep.subr.bf16.mxu0 0
        %622 = vmatpush1.bf16.msra.mxu0 0
        %623 = vmatprep.subr.bf16.mxu0 0
        %624 = vmatpush1.bf16.msra.mxu0 0
        %625 = vmatprep.subr.bf16.mxu0 0
        %626 = vmatpush1.bf16.msra.mxu0 0
        %627 = vmatprep.subr.bf16.mxu0 0
        %628 = vmatpush1.bf16.msra.mxu0 0
        %629 = vmatprep.subr.bf16.mxu0 0
        %630 = vmatpush1.bf16.msra.mxu0 0
        %631 = vmatprep.subr.bf16.mxu0 0
        %632 = vmatpush1.bf16.msra.mxu0 0
        %633 = vmatprep.subr.bf16.mxu0 0
        %634 = vmatpush1.bf16.msra.mxu0 0
        %635 = vmatprep.mubr.bf16.mxu0 0
        %636 = vmatmul.mubr.bf16.gmra.mrb[0].mxu0 %v501
        %v637 = vpop.f32.mrb[0].mxu0
        %v638 = vadd.f32 0.0, %v637
        %v639 = vpop.f32.mrb[0].mxu0
        %v640 = vadd.f32 0.0, %v639
        %v641 = vpop.f32.mrb[0].mxu0
        %v642 = vadd.f32 0.0, %v641
        %v643 = vpop.f32.mrb[0].mxu0
        %v644 = vadd.f32 0.0, %v643
        %645 = vmatprep.mubr.bf16.mxu0 0
        %646 = vmatmul.mubr.bf16.gmra.mrb[0].mxu0 %v504
        %v647 = vpop.f32.mrb[0].mxu0
        %v648 = vadd.f32 0.0, %v647
        %v649 = vpop.f32.mrb[0].mxu0
        %v650 = vadd.f32 0.0, %v649
        %v651 = vpop.f32.mrb[0].mxu0
        %v652 = vadd.f32 0.0, %v651
        %v653 = vpop.f32.mrb[0].mxu0
        %v654 = vadd.f32 0.0, %v653
        %655 = vmatprep.mubr.bf16.mxu0 0
        %656 = vmatmul.mubr.bf16.gmra.mrb[0].mxu0 %v507
        %v657 = vpop.f32.mrb[0].mxu0
        %v658 = vadd.f32 0.0, %v657
        %v659 = vpop.f32.mrb[0].mxu0
        %v660 = vadd.f32 0.0, %v659
        %v661 = vpop.f32.mrb[0].mxu0
        %v662 = vadd.f32 0.0, %v661
        %v663 = vpop.f32.mrb[0].mxu0
        %v664 = vadd.f32 0.0, %v663
        %665 = vmatprep.mubr.bf16.mxu0 0
        %666 = vmatmul.mubr.bf16.gmra.mrb[0].mxu0 %v510
        %v667 = vpop.f32.mrb[0].mxu0
        %v668 = vadd.f32 0.0, %v667
        %v669 = vpop.f32.mrb[0].mxu0
        %v670 = vadd.f32 0.0, %v669
        %v671 = vpop.f32.mrb[0].mxu0
        %v672 = vadd.f32 0.0, %v671
        %v673 = vpop.f32.mrb[0].mxu0
        %v674 = vadd.f32 0.0, %v673
        %675 = vmatprep.mubr.bf16.mxu0 0
        %676 = vmatmul.mubr.bf16.gmra.mrb[0].mxu0 %v513
        %v677 = vpop.f32.mrb[0].mxu0
        %v678 = vadd.f32 0.0, %v677
        %v679 = vpop.f32.mrb[0].mxu0
        %v680 = vadd.f32 0.0, %v679
        %v681 = vpop.f32.mrb[0].mxu0
        %v682 = vadd.f32 0.0, %v681
        %v683 = vpop.f32.mrb[0].mxu0
        %v684 = vadd.f32 0.0, %v683
        %685 = vmatprep.mubr.bf16.mxu0 0
        %686 = vmatmul.mubr.bf16.gmra.mrb[0].mxu0 %v516
        %v687 = vpop.f32.mrb[0].mxu0
        %v688 = vadd.f32 0.0, %v687
        %v689 = vpop.f32.mrb[0].mxu0
        %v690 = vadd.f32 0.0, %v689
        %v691 = vpop.f32.mrb[0].mxu0
        %v692 = vadd.f32 0.0, %v691
        %v693 = vpop.f32.mrb[0].mxu0
        %v694 = vadd.f32 0.0, %v693
        %695 = vmatprep.mubr.bf16.mxu0 0
        %696 = vmatmul.mubr.bf16.gmra.mrb[0].mxu0 %v519
        %v697 = vpop.f32.mrb[0].mxu0
        %v698 = vadd.f32 0.0, %v697
        %v699 = vpop.f32.mrb[0].mxu0
        %v700 = vadd.f32 0.0, %v699
        %v701 = vpop.f32.mrb[0].mxu0
        %v702 = vadd.f32 0.0, %v701
        %v703 = vpop.f32.mrb[0].mxu0
        %v704 = vadd.f32 0.0, %v703
        %705 = vmatprep.mubr.bf16.mxu0 0
        %706 = vmatmul.mubr.bf16.gmra.mrb[0].mxu0 %v522
        %v707 = vpop.f32.mrb[0].mxu0
        %v708 = vadd.f32 0.0, %v707
        %v709 = vpop.f32.mrb[0].mxu0
        %v710 = vadd.f32 0.0, %v709
        %v711 = vpop.f32.mrb[0].mxu0
        %v712 = vadd.f32 0.0, %v711
        %v713 = vpop.f32.mrb[0].mxu0
        %v714 = vadd.f32 0.0, %v713
        %715 = vmatprep.mubr.bf16.mxu0 0
        %716 = vmatmul.mubr.bf16.gmra.mrb[0].mxu0 %v525
        %v717 = vpop.f32.mrb[0].mxu0
        %v718 = vadd.f32 0.0, %v717
        %v719 = vpop.f32.mrb[0].mxu0
        %v720 = vadd.f32 0.0, %v719
        %v721 = vpop.f32.mrb[0].mxu0
        %v722 = vadd.f32 0.0, %v721
        %v723 = vpop.f32.mrb[0].mxu0
        %v724 = vadd.f32 0.0, %v723
        %725 = vmatprep.mubr.bf16.mxu0 0
        %726 = vmatmul.mubr.bf16.gmra.mrb[0].mxu0 %v528
        %v727 = vpop.f32.mrb[0].mxu0
        %v728 = vadd.f32 0.0, %v727
        %v729 = vpop.f32.mrb[0].mxu0
        %v730 = vadd.f32 0.0, %v729
        %v731 = vpop.f32.mrb[0].mxu0
        %v732 = vadd.f32 0.0, %v731
        %v733 = vpop.f32.mrb[0].mxu0
        %v734 = vadd.f32 0.0, %v733
        %735 = vmatprep.mubr.bf16.mxu0 0
        %736 = vmatmul.mubr.bf16.gmra.mrb[0].mxu0 %v531
        %v737 = vpop.f32.mrb[0].mxu0
        %v738 = vadd.f32 0.0, %v737
        %v739 = vpop.f32.mrb[0].mxu0
        %v740 = vadd.f32 0.0, %v739
        %v741 = vpop.f32.mrb[0].mxu0
        %v742 = vadd.f32 0.0, %v741
        %v743 = vpop.f32.mrb[0].mxu0
        %v744 = vadd.f32 0.0, %v743
        %745 = vmatprep.mubr.bf16.mxu0 0
        %746 = vmatmul.mubr.bf16.gmra.mrb[0].mxu0 %v534
        %v747 = vpop.f32.mrb[0].mxu0
        %v748 = vadd.f32 0.0, %v747
        %v749 = vpop.f32.mrb[0].mxu0
        %v750 = vadd.f32 0.0, %v749
        %v751 = vpop.f32.mrb[0].mxu0
        %v752 = vadd.f32 0.0, %v751
        %v753 = vpop.f32.mrb[0].mxu0
        %v754 = vadd.f32 0.0, %v753
        %755 = vmatprep.mubr.bf16.mxu0 0
        %756 = vmatmul.mubr.bf16.gmra.mrb[0].mxu0 %v537
        %v757 = vpop.f32.mrb[0].mxu0
        %v758 = vadd.f32 0.0, %v757
        %v759 = vpop.f32.mrb[0].mxu0
        %v760 = vadd.f32 0.0, %v759
        %v761 = vpop.f32.mrb[0].mxu0
        %v762 = vadd.f32 0.0, %v761
        %v763 = vpop.f32.mrb[0].mxu0
        %v764 = vadd.f32 0.0, %v763
        %765 = vmatprep.mubr.bf16.mxu0 0
        %766 = vmatmul.mubr.bf16.gmra.mrb[0].mxu0 %v540
        %v767 = vpop.f32.mrb[0].mxu0
        %v768 = vadd.f32 0.0, %v767
        %v769 = vpop.f32.mrb[0].mxu0
        %v770 = vadd.f32 0.0, %v769
        %v771 = vpop.f32.mrb[0].mxu0
        %v772 = vadd.f32 0.0, %v771
        %v773 = vpop.f32.mrb[0].mxu0
        %v774 = vadd.f32 0.0, %v773
        %775 = vmatprep.mubr.bf16.mxu0 0
        %776 = vmatmul.mubr.bf16.gmra.mrb[0].mxu0 %v543
        %v777 = vpop.f32.mrb[0].mxu0
        %v778 = vadd.f32 0.0, %v777
        %v779 = vpop.f32.mrb[0].mxu0
        %v780 = vadd.f32 0.0, %v779
        %v781 = vpop.f32.mrb[0].mxu0
        %v782 = vadd.f32 0.0, %v781
        %v783 = vpop.f32.mrb[0].mxu0
        %v784 = vadd.f32 0.0, %v783
        %785 = vmatprep.mubr.bf16.mxu0 0
        %786 = vmatmul.mubr.bf16.gmra.mrb[0].mxu0 %v546
        %v787 = vpop.f32.mrb[0].mxu0
        %v788 = vadd.f32 0.0, %v787
        %v789 = vpop.f32.mrb[0].mxu0
        %v790 = vadd.f32 0.0, %v789
        %v791 = vpop.f32.mrb[0].mxu0
        %v792 = vadd.f32 0.0, %v791
        %v793 = vpop.f32.mrb[0].mxu0
        %v794 = vadd.f32 0.0, %v793
        %795 = vmatprep.mubr.bf16.mxu0 0
        %796 = vmatmul.mubr.bf16.gmra.mrb[0].mxu0 %v549
        %v797 = vpop.f32.mrb[0].mxu0
        %v798 = vadd.f32 0.0, %v797
        %v799 = vpop.f32.mrb[0].mxu0
        %v800 = vadd.f32 0.0, %v799
        %v801 = vpop.f32.mrb[0].mxu0
        %v802 = vadd.f32 0.0, %v801
        %v803 = vpop.f32.mrb[0].mxu0
        %v804 = vadd.f32 0.0, %v803
        %805 = vmatprep.mubr.bf16.mxu0 0
        %806 = vmatmul.mubr.bf16.gmra.mrb[0].mxu0 %v552
        %v807 = vpop.f32.mrb[0].mxu0
        %v808 = vadd.f32 0.0, %v807
        %v809 = vpop.f32.mrb[0].mxu0
        %v810 = vadd.f32 0.0, %v809
        %v811 = vpop.f32.mrb[0].mxu0
        %v812 = vadd.f32 0.0, %v811
        %v813 = vpop.f32.mrb[0].mxu0
        %v814 = vadd.f32 0.0, %v813
        %815 = vmatprep.mubr.bf16.mxu0 0
        %816 = vmatmul.mubr.bf16.gmra.mrb[0].mxu0 %v555
        %v817 = vpop.f32.mrb[0].mxu0
        %v818 = vadd.f32 0.0, %v817
        %v819 = vpop.f32.mrb[0].mxu0
        %v820 = vadd.f32 0.0, %v819
        %v821 = vpop.f32.mrb[0].mxu0
        %v822 = vadd.f32 0.0, %v821
        %v823 = vpop.f32.mrb[0].mxu0
        %v824 = vadd.f32 0.0, %v823
        %825 = vmatprep.mubr.bf16.mxu0 0
        %826 = vmatmul.mubr.bf16.gmra.mrb[0].mxu0 %v558
        %v827 = vpop.f32.mrb[0].mxu0
        %v828 = vadd.f32 0.0, %v827
        %v829 = vpop.f32.mrb[0].mxu0
        %v830 = vadd.f32 0.0, %v829
        %v831 = vpop.f32.mrb[0].mxu0
        %v832 = vadd.f32 0.0, %v831
        %v833 = vpop.f32.mrb[0].mxu0
        %v834 = vadd.f32 0.0, %v833
        %835 = vmatprep.mubr.bf16.mxu0 0
        %836 = vmatmul.mubr.bf16.gmra.mrb[0].mxu0 %v561
        %v837 = vpop.f32.mrb[0].mxu0
        %v838 = vadd.f32 0.0, %v837
        %v839 = vpop.f32.mrb[0].mxu0
        %v840 = vadd.f32 0.0, %v839
        %v841 = vpop.f32.mrb[0].mxu0
        %v842 = vadd.f32 0.0, %v841
        %v843 = vpop.f32.mrb[0].mxu0
        %v844 = vadd.f32 0.0, %v843
        %845 = vmatprep.mubr.bf16.mxu0 0
        %846 = vmatmul.mubr.bf16.gmra.mrb[0].mxu0 %v564
        %v847 = vpop.f32.mrb[0].mxu0
        %v848 = vadd.f32 0.0, %v847
        %v849 = vpop.f32.mrb[0].mxu0
        %v850 = vadd.f32 0.0, %v849
        %v851 = vpop.f32.mrb[0].mxu0
        %v852 = vadd.f32 0.0, %v851
        %v853 = vpop.f32.mrb[0].mxu0
        %v854 = vadd.f32 0.0, %v853
        %855 = vmatprep.mubr.bf16.mxu0 0
        %856 = vmatmul.mubr.bf16.gmra.mrb[0].mxu0 %v567
        %v857 = vpop.f32.mrb[0].mxu0
        %v858 = vadd.f32 0.0, %v857
        %v859 = vpop.f32.mrb[0].mxu0
        %v860 = vadd.f32 0.0, %v859
        %v861 = vpop.f32.mrb[0].mxu0
        %v862 = vadd.f32 0.0, %v861
        %v863 = vpop.f32.mrb[0].mxu0
        %v864 = vadd.f32 0.0, %v863
        %865 = vmatprep.mubr.bf16.mxu0 0
        %866 = vmatmul.mubr.bf16.gmra.mrb[0].mxu0 %v570
        %v867 = vpop.f32.mrb[0].mxu0
        %v868 = vadd.f32 0.0, %v867
        %v869 = vpop.f32.mrb[0].mxu0
        %v870 = vadd.f32 0.0, %v869
        %v871 = vpop.f32.mrb[0].mxu0
        %v872 = vadd.f32 0.0, %v871
        %v873 = vpop.f32.mrb[0].mxu0
        %v874 = vadd.f32 0.0, %v873
        %875 = vmatprep.mubr.bf16.mxu0 0
        %876 = vmatmul.mubr.bf16.gmra.mrb[0].mxu0 %v573
        %v877 = vpop.f32.mrb[0].mxu0
        %v878 = vadd.f32 0.0, %v877
        %v879 = vpop.f32.mrb[0].mxu0
        %v880 = vadd.f32 0.0, %v879
        %v881 = vpop.f32.mrb[0].mxu0
        %v882 = vadd.f32 0.0, %v881
        %v883 = vpop.f32.mrb[0].mxu0
        %v884 = vadd.f32 0.0, %v883
        %885 = vmatprep.mubr.bf16.mxu0 0
        %886 = vmatmul.mubr.bf16.gmra.mrb[0].mxu0 %v576
        %v887 = vpop.f32.mrb[0].mxu0
        %v888 = vadd.f32 0.0, %v887
        %v889 = vpop.f32.mrb[0].mxu0
        %v890 = vadd.f32 0.0, %v889
        %v891 = vpop.f32.mrb[0].mxu0
        %v892 = vadd.f32 0.0, %v891
        %v893 = vpop.f32.mrb[0].mxu0
        %v894 = vadd.f32 0.0, %v893
        %895 = vmatprep.mubr.bf16.mxu0 0
        %896 = vmatmul.mubr.bf16.gmra.mrb[0].mxu0 %v579
        %v897 = vpop.f32.mrb[0].mxu0
        %v898 = vadd.f32 0.0, %v897
        %v899 = vpop.f32.mrb[0].mxu0
        %v900 = vadd.f32 0.0, %v899
        %v901 = vpop.f32.mrb[0].mxu0
        %v902 = vadd.f32 0.0, %v901
        %v903 = vpop.f32.mrb[0].mxu0
        %v904 = vadd.f32 0.0, %v903
        %905 = vmatprep.mubr.bf16.mxu0 0
        %906 = vmatmul.mubr.bf16.gmra.mrb[0].mxu0 %v582
        %v907 = vpop.f32.mrb[0].mxu0
        %v908 = vadd.f32 0.0, %v907
        %v909 = vpop.f32.mrb[0].mxu0
        %v910 = vadd.f32 0.0, %v909
        %v911 = vpop.f32.mrb[0].mxu0
        %v912 = vadd.f32 0.0, %v911
        %v913 = vpop.f32.mrb[0].mxu0
        %v914 = vadd.f32 0.0, %v913
        %915 = vmatprep.mubr.bf16.mxu0 0
        %916 = vmatmul.mubr.bf16.gmra.mrb[0].mxu0 %v585
        %v917 = vpop.f32.mrb[0].mxu0
        %v918 = vadd.f32 0.0, %v917
        %v919 = vpop.f32.mrb[0].mxu0
        %v920 = vadd.f32 0.0, %v919
        %v921 = vpop.f32.mrb[0].mxu0
        %v922 = vadd.f32 0.0, %v921
        %v923 = vpop.f32.mrb[0].mxu0
        %v924 = vadd.f32 0.0, %v923
        %925 = vmatprep.mubr.bf16.mxu0 0
        %926 = vmatmul.mubr.bf16.gmra.mrb[0].mxu0 %v588
        %v927 = vpop.f32.mrb[0].mxu0
        %v928 = vadd.f32 0.0, %v927
        %v929 = vpop.f32.mrb[0].mxu0
        %v930 = vadd.f32 0.0, %v929
        %v931 = vpop.f32.mrb[0].mxu0
        %v932 = vadd.f32 0.0, %v931
        %v933 = vpop.f32.mrb[0].mxu0
        %v934 = vadd.f32 0.0, %v933
        %935 = vmatprep.mubr.bf16.mxu0 0
        %936 = vmatmul.mubr.bf16.gmra.mrb[0].mxu0 %v591
        %v937 = vpop.f32.mrb[0].mxu0
        %v938 = vadd.f32 0.0, %v937
        %v939 = vpop.f32.mrb[0].mxu0
        %v940 = vadd.f32 0.0, %v939
        %v941 = vpop.f32.mrb[0].mxu0
        %v942 = vadd.f32 0.0, %v941
        %v943 = vpop.f32.mrb[0].mxu0
        %v944 = vadd.f32 0.0, %v943
        %945 = vmatprep.mubr.bf16.mxu0 0
        %946 = vmatmul.mubr.bf16.gmra.mrb[0].mxu0 %v594
        %v947 = vpop.f32.mrb[0].mxu0
        %v948 = vadd.f32 0.0, %v947
        %v949 = vpop.f32.mrb[0].mxu0
        %v950 = vadd.f32 0.0, %v949
        %v951 = vpop.f32.mrb[0].mxu0
        %v952 = vadd.f32 0.0, %v951
        %v953 = vpop.f32.mrb[0].mxu0
        %v954 = vadd.f32 0.0, %v953
        %955 = vdwg.mxu0
        %v956 = vmax.f32 %v638, 0.0
        %v957 = vmax.f32 %v640, 0.0
        %v958 = vmax.f32 %v642, 0.0
        %v959 = vmax.f32 %v644, 0.0
        %v960 = vmax.f32 %v648, 0.0
        %v961 = vmax.f32 %v650, 0.0
        %v962 = vmax.f32 %v652, 0.0
        %v963 = vmax.f32 %v654, 0.0
        %v964 = vmax.f32 %v658, 0.0
        %v965 = vmax.f32 %v660, 0.0
        %v966 = vmax.f32 %v662, 0.0
        %v967 = vmax.f32 %v664, 0.0
        %v968 = vmax.f32 %v668, 0.0
        %v969 = vmax.f32 %v670, 0.0
        %v970 = vmax.f32 %v672, 0.0
        %v971 = vmax.f32 %v674, 0.0
        %v972 = vmax.f32 %v678, 0.0
        %v973 = vmax.f32 %v680, 0.0
        %v974 = vmax.f32 %v682, 0.0
        %v975 = vmax.f32 %v684, 0.0
        %v976 = vmax.f32 %v688, 0.0
        %v977 = vmax.f32 %v690, 0.0
        %v978 = vmax.f32 %v692, 0.0
        %v979 = vmax.f32 %v694, 0.0
        %v980 = vmax.f32 %v698, 0.0
        %v981 = vmax.f32 %v700, 0.0
        %v982 = vmax.f32 %v702, 0.0
        %v983 = vmax.f32 %v704, 0.0
        %v984 = vmax.f32 %v708, 0.0
        %v985 = vmax.f32 %v710, 0.0
        %v986 = vmax.f32 %v712, 0.0
        %v987 = vmax.f32 %v714, 0.0
        %v988 = vmax.f32 %v718, 0.0
        %v989 = vmax.f32 %v720, 0.0
        %v990 = vmax.f32 %v722, 0.0
        %v991 = vmax.f32 %v724, 0.0
        %v992 = vmax.f32 %v728, 0.0
        %v993 = vmax.f32 %v730, 0.0
        %v994 = vmax.f32 %v732, 0.0
        %v995 = vmax.f32 %v734, 0.0
        %v996 = vmax.f32 %v738, 0.0
        %v997 = vmax.f32 %v740, 0.0
        %v998 = vmax.f32 %v742, 0.0
        %v999 = vmax.f32 %v744, 0.0
        %v1000 = vmax.f32 %v748, 0.0
        %v1001 = vmax.f32 %v750, 0.0
        %v1002 = vmax.f32 %v752, 0.0
        %v1003 = vmax.f32 %v754, 0.0
        %v1004 = vmax.f32 %v758, 0.0
        %v1005 = vmax.f32 %v760, 0.0
        %v1006 = vmax.f32 %v762, 0.0
        %v1007 = vmax.f32 %v764, 0.0
        %v1008 = vmax.f32 %v768, 0.0
        %v1009 = vmax.f32 %v770, 0.0
        %v1010 = vmax.f32 %v772, 0.0
        %v1011 = vmax.f32 %v774, 0.0
        %v1012 = vmax.f32 %v778, 0.0
        %v1013 = vmax.f32 %v780, 0.0
        %v1014 = vmax.f32 %v782, 0.0
        %v1015 = vmax.f32 %v784, 0.0
        %v1016 = vmax.f32 %v788, 0.0
        %v1017 = vmax.f32 %v790, 0.0
        %v1018 = vmax.f32 %v792, 0.0
        %v1019 = vmax.f32 %v794, 0.0
        %v1020 = vmax.f32 %v798, 0.0
        %v1021 = vmax.f32 %v800, 0.0
        %v1022 = vmax.f32 %v802, 0.0
        %v1023 = vmax.f32 %v804, 0.0
        %v1024 = vmax.f32 %v808, 0.0
        %v1025 = vmax.f32 %v810, 0.0
        %v1026 = vmax.f32 %v812, 0.0
        %v1027 = vmax.f32 %v814, 0.0
        %v1028 = vmax.f32 %v818, 0.0
        %v1029 = vmax.f32 %v820, 0.0
        %v1030 = vmax.f32 %v822, 0.0
        %v1031 = vmax.f32 %v824, 0.0
        %v1032 = vmax.f32 %v828, 0.0
        %v1033 = vmax.f32 %v830, 0.0
        %v1034 = vmax.f32 %v832, 0.0
        %v1035 = vmax.f32 %v834, 0.0
        %v1036 = vmax.f32 %v838, 0.0
        %v1037 = vmax.f32 %v840, 0.0
        %v1038 = vmax.f32 %v842, 0.0
        %v1039 = vmax.f32 %v844, 0.0
        %v1040 = vmax.f32 %v848, 0.0
        %v1041 = vmax.f32 %v850, 0.0
        %v1042 = vmax.f32 %v852, 0.0
        %v1043 = vmax.f32 %v854, 0.0
        %v1044 = vmax.f32 %v858, 0.0
        %v1045 = vmax.f32 %v860, 0.0
        %v1046 = vmax.f32 %v862, 0.0
        %v1047 = vmax.f32 %v864, 0.0
        %v1048 = vmax.f32 %v868, 0.0
        %v1049 = vmax.f32 %v870, 0.0
        %v1050 = vmax.f32 %v872, 0.0
        %v1051 = vmax.f32 %v874, 0.0
        %v1052 = vmax.f32 %v878, 0.0
        %v1053 = vmax.f32 %v880, 0.0
        %v1054 = vmax.f32 %v882, 0.0
        %v1055 = vmax.f32 %v884, 0.0
        %v1056 = vmax.f32 %v888, 0.0
        %v1057 = vmax.f32 %v890, 0.0
        %v1058 = vmax.f32 %v892, 0.0
        %v1059 = vmax.f32 %v894, 0.0
        %v1060 = vmax.f32 %v898, 0.0
        %v1061 = vmax.f32 %v900, 0.0
        %v1062 = vmax.f32 %v902, 0.0
        %v1063 = vmax.f32 %v904, 0.0
        %v1064 = vmax.f32 %v908, 0.0
        %v1065 = vmax.f32 %v910, 0.0
        %v1066 = vmax.f32 %v912, 0.0
        %v1067 = vmax.f32 %v914, 0.0
        %v1068 = vmax.f32 %v918, 0.0
        %v1069 = vmax.f32 %v920, 0.0
        %v1070 = vmax.f32 %v922, 0.0
        %v1071 = vmax.f32 %v924, 0.0
        %v1072 = vmax.f32 %v928, 0.0
        %v1073 = vmax.f32 %v930, 0.0
        %v1074 = vmax.f32 %v932, 0.0
        %v1075 = vmax.f32 %v934, 0.0
        %v1076 = vmax.f32 %v938, 0.0
        %v1077 = vmax.f32 %v940, 0.0
        %v1078 = vmax.f32 %v942, 0.0
        %v1079 = vmax.f32 %v944, 0.0
        %v1080 = vmax.f32 %v948, 0.0
        %v1081 = vmax.f32 %v950, 0.0
        %v1082 = vmax.f32 %v952, 0.0
        %v1083 = vmax.f32 %v954, 0.0
        %v1084 = vld [vmem:[%s2] sm:$0xff]
        %v1085 = vld [vmem:[%s2 + $0x8] sm:$0xff]
        %v1086 = vld [vmem:[%s2 + $0x10] sm:$0xff]
        %v1087 = vld [vmem:[%s2 + $0x18] sm:$0xff]
        %v1088 = vld [vmem:[%s2 + $0x20] sm:$0xff]
        %v1089 = vld [vmem:[%s2 + $0x28] sm:$0xff]
        %v1090 = vld [vmem:[%s2 + $0x30] sm:$0xff]
        %v1091 = vld [vmem:[%s2 + $0x38] sm:$0xff]
        %v1092 = vld [vmem:[%s2 + $0x40] sm:$0xff]
        %v1093 = vld [vmem:[%s2 + $0x48] sm:$0xff]
        %v1094 = vld [vmem:[%s2 + $0x50] sm:$0xff]
        %v1095 = vld [vmem:[%s2 + $0x58] sm:$0xff]
        %v1096 = vld [vmem:[%s2 + $0x60] sm:$0xff]
        %v1097 = vld [vmem:[%s2 + $0x68] sm:$0xff]
        %v1098 = vld [vmem:[%s2 + $0x70] sm:$0xff]
        %v1099 = vld [vmem:[%s2 + $0x78] sm:$0xff]
        %v1100 = vld [vmem:[%s2 + $0x80] sm:$0xff]
        %v1101 = vld [vmem:[%s2 + $0x88] sm:$0xff]
        %v1102 = vld [vmem:[%s2 + $0x90] sm:$0xff]
        %v1103 = vld [vmem:[%s2 + $0x98] sm:$0xff]
        %v1104 = vld [vmem:[%s2 + $0xa0] sm:$0xff]
        %v1105 = vld [vmem:[%s2 + $0xa8] sm:$0xff]
        %v1106 = vld [vmem:[%s2 + $0xb0] sm:$0xff]
        %v1107 = vld [vmem:[%s2 + $0xb8] sm:$0xff]
        %v1108 = vld [vmem:[%s2 + $0xc0] sm:$0xff]
        %v1109 = vld [vmem:[%s2 + $0xc8] sm:$0xff]
        %v1110 = vld [vmem:[%s2 + $0xd0] sm:$0xff]
        %v1111 = vld [vmem:[%s2 + $0xd8] sm:$0xff]
        %v1112 = vld [vmem:[%s2 + $0xe0] sm:$0xff]
        %v1113 = vld [vmem:[%s2 + $0xe8] sm:$0xff]
        %v1114 = vld [vmem:[%s2 + $0xf0] sm:$0xff]
        %v1115 = vld [vmem:[%s2 + $0xf8] sm:$0xff]
        %v1116 = vld [vmem:[%s2 + $0x100] sm:$0xff]
        %v1117 = vld [vmem:[%s2 + $0x108] sm:$0xff]
        %v1118 = vld [vmem:[%s2 + $0x110] sm:$0xff]
        %v1119 = vld [vmem:[%s2 + $0x118] sm:$0xff]
        %v1120 = vld [vmem:[%s2 + $0x120] sm:$0xff]
        %v1121 = vld [vmem:[%s2 + $0x128] sm:$0xff]
        %v1122 = vld [vmem:[%s2 + $0x130] sm:$0xff]
        %v1123 = vld [vmem:[%s2 + $0x138] sm:$0xff]
        %v1124 = vld [vmem:[%s2 + $0x140] sm:$0xff]
        %v1125 = vld [vmem:[%s2 + $0x148] sm:$0xff]
        %v1126 = vld [vmem:[%s2 + $0x150] sm:$0xff]
        %v1127 = vld [vmem:[%s2 + $0x158] sm:$0xff]
        %v1128 = vld [vmem:[%s2 + $0x160] sm:$0xff]
        %v1129 = vld [vmem:[%s2 + $0x168] sm:$0xff]
        %v1130 = vld [vmem:[%s2 + $0x170] sm:$0xff]
        %v1131 = vld [vmem:[%s2 + $0x178] sm:$0xff]
        %v1132 = vld [vmem:[%s2 + $0x180] sm:$0xff]
        %v1133 = vld [vmem:[%s2 + $0x188] sm:$0xff]
        %v1134 = vld [vmem:[%s2 + $0x190] sm:$0xff]
        %v1135 = vld [vmem:[%s2 + $0x198] sm:$0xff]
        %v1136 = vld [vmem:[%s2 + $0x1a0] sm:$0xff]
        %v1137 = vld [vmem:[%s2 + $0x1a8] sm:$0xff]
        %v1138 = vld [vmem:[%s2 + $0x1b0] sm:$0xff]
        %v1139 = vld [vmem:[%s2 + $0x1b8] sm:$0xff]
        %v1140 = vld [vmem:[%s2 + $0x1c0] sm:$0xff]
        %v1141 = vld [vmem:[%s2 + $0x1c8] sm:$0xff]
        %v1142 = vld [vmem:[%s2 + $0x1d0] sm:$0xff]
        %v1143 = vld [vmem:[%s2 + $0x1d8] sm:$0xff]
        %v1144 = vld [vmem:[%s2 + $0x1e0] sm:$0xff]
        %v1145 = vld [vmem:[%s2 + $0x1e8] sm:$0xff]
        %v1146 = vld [vmem:[%s2 + $0x1f0] sm:$0xff]
        %v1147 = vld [vmem:[%s2 + $0x1f8] sm:$0xff]
        %1149 = vset.pattern.permute.xlu0 0
        %1150 = vperm.xlu0 %1149, %v1084
        %v1151 = vpop.permute.xlu0 %1150
        %1154 = vset.pattern.permute.xlu0 0
        %1155 = vperm.xlu0 %1154, %v1085
        %v1156 = vpop.permute.xlu0 %1155
        %1159 = vset.pattern.permute.xlu0 0
        %1160 = vperm.xlu0 %1159, %v1086
        %v1161 = vpop.permute.xlu0 %1160
        %1164 = vset.pattern.permute.xlu0 0
        %1165 = vperm.xlu0 %1164, %v1087
        %v1166 = vpop.permute.xlu0 %1165
        %1169 = vset.pattern.permute.xlu0 0
        %1170 = vperm.xlu0 %1169, %v1088
        %v1171 = vpop.permute.xlu0 %1170
        %1174 = vset.pattern.permute.xlu0 0
        %1175 = vperm.xlu0 %1174, %v1089
        %v1176 = vpop.permute.xlu0 %1175
        %1179 = vset.pattern.permute.xlu0 0
        %1180 = vperm.xlu0 %1179, %v1090
        %v1181 = vpop.permute.xlu0 %1180
        %1184 = vset.pattern.permute.xlu0 0
        %1185 = vperm.xlu0 %1184, %v1091
        %v1186 = vpop.permute.xlu0 %1185
        %1189 = vset.pattern.permute.xlu0 0
        %1190 = vperm.xlu0 %1189, %v1092
        %v1191 = vpop.permute.xlu0 %1190
        %1194 = vset.pattern.permute.xlu0 0
        %1195 = vperm.xlu0 %1194, %v1093
        %v1196 = vpop.permute.xlu0 %1195
        %1199 = vset.pattern.permute.xlu0 0
        %1200 = vperm.xlu0 %1199, %v1094
        %v1201 = vpop.permute.xlu0 %1200
        %1204 = vset.pattern.permute.xlu0 0
        %1205 = vperm.xlu0 %1204, %v1095
        %v1206 = vpop.permute.xlu0 %1205
        %1209 = vset.pattern.permute.xlu0 0
        %1210 = vperm.xlu0 %1209, %v1096
        %v1211 = vpop.permute.xlu0 %1210
        %1214 = vset.pattern.permute.xlu0 0
        %1215 = vperm.xlu0 %1214, %v1097
        %v1216 = vpop.permute.xlu0 %1215
        %1219 = vset.pattern.permute.xlu0 0
        %1220 = vperm.xlu0 %1219, %v1098
        %v1221 = vpop.permute.xlu0 %1220
        %1224 = vset.pattern.permute.xlu0 0
        %1225 = vperm.xlu0 %1224, %v1099
        %v1226 = vpop.permute.xlu0 %1225
        %1229 = vset.pattern.permute.xlu0 0
        %1230 = vperm.xlu0 %1229, %v1100
        %v1231 = vpop.permute.xlu0 %1230
        %1234 = vset.pattern.permute.xlu0 0
        %1235 = vperm.xlu0 %1234, %v1101
        %v1236 = vpop.permute.xlu0 %1235
        %1239 = vset.pattern.permute.xlu0 0
        %1240 = vperm.xlu0 %1239, %v1102
        %v1241 = vpop.permute.xlu0 %1240
        %1244 = vset.pattern.permute.xlu0 0
        %1245 = vperm.xlu0 %1244, %v1103
        %v1246 = vpop.permute.xlu0 %1245
        %1249 = vset.pattern.permute.xlu0 0
        %1250 = vperm.xlu0 %1249, %v1104
        %v1251 = vpop.permute.xlu0 %1250
        %1254 = vset.pattern.permute.xlu0 0
        %1255 = vperm.xlu0 %1254, %v1105
        %v1256 = vpop.permute.xlu0 %1255
        %1259 = vset.pattern.permute.xlu0 0
        %1260 = vperm.xlu0 %1259, %v1106
        %v1261 = vpop.permute.xlu0 %1260
        %1264 = vset.pattern.permute.xlu0 0
        %1265 = vperm.xlu0 %1264, %v1107
        %v1266 = vpop.permute.xlu0 %1265
        %1269 = vset.pattern.permute.xlu0 0
        %1270 = vperm.xlu0 %1269, %v1108
        %v1271 = vpop.permute.xlu0 %1270
        %1274 = vset.pattern.permute.xlu0 0
        %1275 = vperm.xlu0 %1274, %v1109
        %v1276 = vpop.permute.xlu0 %1275
        %1279 = vset.pattern.permute.xlu0 0
        %1280 = vperm.xlu0 %1279, %v1110
        %v1281 = vpop.permute.xlu0 %1280
        %1284 = vset.pattern.permute.xlu0 0
        %1285 = vperm.xlu0 %1284, %v1111
        %v1286 = vpop.permute.xlu0 %1285
        %1289 = vset.pattern.permute.xlu0 0
        %1290 = vperm.xlu0 %1289, %v1112
        %v1291 = vpop.permute.xlu0 %1290
        %1294 = vset.pattern.permute.xlu0 0
        %1295 = vperm.xlu0 %1294, %v1113
        %v1296 = vpop.permute.xlu0 %1295
        %1299 = vset.pattern.permute.xlu0 0
        %1300 = vperm.xlu0 %1299, %v1114
        %v1301 = vpop.permute.xlu0 %1300
        %1304 = vset.pattern.permute.xlu0 0
        %1305 = vperm.xlu0 %1304, %v1115
        %v1306 = vpop.permute.xlu0 %1305
        %1309 = vset.pattern.permute.xlu0 0
        %1310 = vperm.xlu0 %1309, %v1116
        %v1311 = vpop.permute.xlu0 %1310
        %1314 = vset.pattern.permute.xlu0 0
        %1315 = vperm.xlu0 %1314, %v1117
        %v1316 = vpop.permute.xlu0 %1315
        %1319 = vset.pattern.permute.xlu0 0
        %1320 = vperm.xlu0 %1319, %v1118
        %v1321 = vpop.permute.xlu0 %1320
        %1324 = vset.pattern.permute.xlu0 0
        %1325 = vperm.xlu0 %1324, %v1119
        %v1326 = vpop.permute.xlu0 %1325
        %1329 = vset.pattern.permute.xlu0 0
        %1330 = vperm.xlu0 %1329, %v1120
        %v1331 = vpop.permute.xlu0 %1330
        %1334 = vset.pattern.permute.xlu0 0
        %1335 = vperm.xlu0 %1334, %v1121
        %v1336 = vpop.permute.xlu0 %1335
        %1339 = vset.pattern.permute.xlu0 0
        %1340 = vperm.xlu0 %1339, %v1122
        %v1341 = vpop.permute.xlu0 %1340
        %1344 = vset.pattern.permute.xlu0 0
        %1345 = vperm.xlu0 %1344, %v1123
        %v1346 = vpop.permute.xlu0 %1345
        %1349 = vset.pattern.permute.xlu0 0
        %1350 = vperm.xlu0 %1349, %v1124
        %v1351 = vpop.permute.xlu0 %1350
        %1354 = vset.pattern.permute.xlu0 0
        %1355 = vperm.xlu0 %1354, %v1125
        %v1356 = vpop.permute.xlu0 %1355
        %1359 = vset.pattern.permute.xlu0 0
        %1360 = vperm.xlu0 %1359, %v1126
        %v1361 = vpop.permute.xlu0 %1360
        %1364 = vset.pattern.permute.xlu0 0
        %1365 = vperm.xlu0 %1364, %v1127
        %v1366 = vpop.permute.xlu0 %1365
        %1369 = vset.pattern.permute.xlu0 0
        %1370 = vperm.xlu0 %1369, %v1128
        %v1371 = vpop.permute.xlu0 %1370
        %1374 = vset.pattern.permute.xlu0 0
        %1375 = vperm.xlu0 %1374, %v1129
        %v1376 = vpop.permute.xlu0 %1375
        %1379 = vset.pattern.permute.xlu0 0
        %1380 = vperm.xlu0 %1379, %v1130
        %v1381 = vpop.permute.xlu0 %1380
        %1384 = vset.pattern.permute.xlu0 0
        %1385 = vperm.xlu0 %1384, %v1131
        %v1386 = vpop.permute.xlu0 %1385
        %1389 = vset.pattern.permute.xlu0 0
        %1390 = vperm.xlu0 %1389, %v1132
        %v1391 = vpop.permute.xlu0 %1390
        %1394 = vset.pattern.permute.xlu0 0
        %1395 = vperm.xlu0 %1394, %v1133
        %v1396 = vpop.permute.xlu0 %1395
        %1399 = vset.pattern.permute.xlu0 0
        %1400 = vperm.xlu0 %1399, %v1134
        %v1401 = vpop.permute.xlu0 %1400
        %1404 = vset.pattern.permute.xlu0 0
        %1405 = vperm.xlu0 %1404, %v1135
        %v1406 = vpop.permute.xlu0 %1405
        %1409 = vset.pattern.permute.xlu0 0
        %1410 = vperm.xlu0 %1409, %v1136
        %v1411 = vpop.permute.xlu0 %1410
        %1414 = vset.pattern.permute.xlu0 0
        %1415 = vperm.xlu0 %1414, %v1137
        %v1416 = vpop.permute.xlu0 %1415
        %1419 = vset.pattern.permute.xlu0 0
        %1420 = vperm.xlu0 %1419, %v1138
        %v1421 = vpop.permute.xlu0 %1420
        %1424 = vset.pattern.permute.xlu0 0
        %1425 = vperm.xlu0 %1424, %v1139
        %v1426 = vpop.permute.xlu0 %1425
        %1429 = vset.pattern.permute.xlu0 0
        %1430 = vperm.xlu0 %1429, %v1140
        %v1431 = vpop.permute.xlu0 %1430
        %1434 = vset.pattern.permute.xlu0 0
        %1435 = vperm.xlu0 %1434, %v1141
        %v1436 = vpop.permute.xlu0 %1435
        %1439 = vset.pattern.permute.xlu0 0
        %1440 = vperm.xlu0 %1439, %v1142
        %v1441 = vpop.permute.xlu0 %1440
        %1444 = vset.pattern.permute.xlu0 0
        %1445 = vperm.xlu0 %1444, %v1143
        %v1446 = vpop.permute.xlu0 %1445
        %1449 = vset.pattern.permute.xlu0 0
        %1450 = vperm.xlu0 %1449, %v1144
        %v1451 = vpop.permute.xlu0 %1450
        %1454 = vset.pattern.permute.xlu0 0
        %1455 = vperm.xlu0 %1454, %v1145
        %v1456 = vpop.permute.xlu0 %1455
        %1459 = vset.pattern.permute.xlu0 0
        %1460 = vperm.xlu0 %1459, %v1146
        %v1461 = vpop.permute.xlu0 %1460
        %1464 = vset.pattern.permute.xlu0 0
        %1465 = vperm.xlu0 %1464, %v1147
        %v1466 = vpop.permute.xlu0 %1465
        %v1468 = vmul.f32 %v1151, %v956
        %v1469 = vmul.f32 %v1151, %v957
        %v1470 = vmul.f32 %v1156, %v958
        %v1471 = vmul.f32 %v1156, %v959
        %v1472 = vmul.f32 %v1161, %v960
        %v1473 = vmul.f32 %v1161, %v961
        %v1474 = vmul.f32 %v1166, %v962
        %v1475 = vmul.f32 %v1166, %v963
        %v1476 = vmul.f32 %v1171, %v964
        %v1477 = vmul.f32 %v1171, %v965
        %v1478 = vmul.f32 %v1176, %v966
        %v1479 = vmul.f32 %v1176, %v967
        %v1480 = vmul.f32 %v1181, %v968
        %v1481 = vmul.f32 %v1181, %v969
        %v1482 = vmul.f32 %v1186, %v970
        %v1483 = vmul.f32 %v1186, %v971
        %v1484 = vmul.f32 %v1191, %v972
        %v1485 = vmul.f32 %v1191, %v973
        %v1486 = vmul.f32 %v1196, %v974
        %v1487 = vmul.f32 %v1196, %v975
        %v1488 = vmul.f32 %v1201, %v976
        %v1489 = vmul.f32 %v1201, %v977
        %v1490 = vmul.f32 %v1206, %v978
        %v1491 = vmul.f32 %v1206, %v979
        %v1492 = vmul.f32 %v1211, %v980
        %v1493 = vmul.f32 %v1211, %v981
        %v1494 = vmul.f32 %v1216, %v982
        %v1495 = vmul.f32 %v1216, %v983
        %v1496 = vmul.f32 %v1221, %v984
        %v1497 = vmul.f32 %v1221, %v985
        %v1498 = vmul.f32 %v1226, %v986
        %v1499 = vmul.f32 %v1226, %v987
        %v1500 = vmul.f32 %v1231, %v988
        %v1501 = vmul.f32 %v1231, %v989
        %v1502 = vmul.f32 %v1236, %v990
        %v1503 = vmul.f32 %v1236, %v991
        %v1504 = vmul.f32 %v1241, %v992
        %v1505 = vmul.f32 %v1241, %v993
        %v1506 = vmul.f32 %v1246, %v994
        %v1507 = vmul.f32 %v1246, %v995
        %v1508 = vmul.f32 %v1251, %v996
        %v1509 = vmul.f32 %v1251, %v997
        %v1510 = vmul.f32 %v1256, %v998
        %v1511 = vmul.f32 %v1256, %v999
        %v1512 = vmul.f32 %v1261, %v1000
        %v1513 = vmul.f32 %v1261, %v1001
        %v1514 = vmul.f32 %v1266, %v1002
        %v1515 = vmul.f32 %v1266, %v1003
        %v1516 = vmul.f32 %v1271, %v1004
        %v1517 = vmul.f32 %v1271, %v1005
        %v1518 = vmul.f32 %v1276, %v1006
        %v1519 = vmul.f32 %v1276, %v1007
        %v1520 = vmul.f32 %v1281, %v1008
        %v1521 = vmul.f32 %v1281, %v1009
        %v1522 = vmul.f32 %v1286, %v1010
        %v1523 = vmul.f32 %v1286, %v1011
        %v1524 = vmul.f32 %v1291, %v1012
        %v1525 = vmul.f32 %v1291, %v1013
        %v1526 = vmul.f32 %v1296, %v1014
        %v1527 = vmul.f32 %v1296, %v1015
        %v1528 = vmul.f32 %v1301, %v1016
        %v1529 = vmul.f32 %v1301, %v1017
        %v1530 = vmul.f32 %v1306, %v1018
        %v1531 = vmul.f32 %v1306, %v1019
        %v1532 = vmul.f32 %v1311, %v1020
        %v1533 = vmul.f32 %v1311, %v1021
        %v1534 = vmul.f32 %v1316, %v1022
        %v1535 = vmul.f32 %v1316, %v1023
        %v1536 = vmul.f32 %v1321, %v1024
        %v1537 = vmul.f32 %v1321, %v1025
        %v1538 = vmul.f32 %v1326, %v1026
        %v1539 = vmul.f32 %v1326, %v1027
        %v1540 = vmul.f32 %v1331, %v1028
        %v1541 = vmul.f32 %v1331, %v1029
        %v1542 = vmul.f32 %v1336, %v1030
        %v1543 = vmul.f32 %v1336, %v1031
        %v1544 = vmul.f32 %v1341, %v1032
        %v1545 = vmul.f32 %v1341, %v1033
        %v1546 = vmul.f32 %v1346, %v1034
        %v1547 = vmul.f32 %v1346, %v1035
        %v1548 = vmul.f32 %v1351, %v1036
        %v1549 = vmul.f32 %v1351, %v1037
        %v1550 = vmul.f32 %v1356, %v1038
        %v1551 = vmul.f32 %v1356, %v1039
        %v1552 = vmul.f32 %v1361, %v1040
        %v1553 = vmul.f32 %v1361, %v1041
        %v1554 = vmul.f32 %v1366, %v1042
        %v1555 = vmul.f32 %v1366, %v1043
        %v1556 = vmul.f32 %v1371, %v1044
        %v1557 = vmul.f32 %v1371, %v1045
        %v1558 = vmul.f32 %v1376, %v1046
        %v1559 = vmul.f32 %v1376, %v1047
        %v1560 = vmul.f32 %v1381, %v1048
        %v1561 = vmul.f32 %v1381, %v1049
        %v1562 = vmul.f32 %v1386, %v1050
        %v1563 = vmul.f32 %v1386, %v1051
        %v1564 = vmul.f32 %v1391, %v1052
        %v1565 = vmul.f32 %v1391, %v1053
        %v1566 = vmul.f32 %v1396, %v1054
        %v1567 = vmul.f32 %v1396, %v1055
        %v1568 = vmul.f32 %v1401, %v1056
        %v1569 = vmul.f32 %v1401, %v1057
        %v1570 = vmul.f32 %v1406, %v1058
        %v1571 = vmul.f32 %v1406, %v1059
        %v1572 = vmul.f32 %v1411, %v1060
        %v1573 = vmul.f32 %v1411, %v1061
        %v1574 = vmul.f32 %v1416, %v1062
        %v1575 = vmul.f32 %v1416, %v1063
        %v1576 = vmul.f32 %v1421, %v1064
        %v1577 = vmul.f32 %v1421, %v1065
        %v1578 = vmul.f32 %v1426, %v1066
        %v1579 = vmul.f32 %v1426, %v1067
        %v1580 = vmul.f32 %v1431, %v1068
        %v1581 = vmul.f32 %v1431, %v1069
        %v1582 = vmul.f32 %v1436, %v1070
        %v1583 = vmul.f32 %v1436, %v1071
        %v1584 = vmul.f32 %v1441, %v1072
        %v1585 = vmul.f32 %v1441, %v1073
        %v1586 = vmul.f32 %v1446, %v1074
        %v1587 = vmul.f32 %v1446, %v1075
        %v1588 = vmul.f32 %v1451, %v1076
        %v1589 = vmul.f32 %v1451, %v1077
        %v1590 = vmul.f32 %v1456, %v1078
        %v1591 = vmul.f32 %v1456, %v1079
        %v1592 = vmul.f32 %v1461, %v1080
        %v1593 = vmul.f32 %v1461, %v1081
        %v1594 = vmul.f32 %v1466, %v1082
        %v1595 = vmul.f32 %v1466, %v1083
        %v1596 = vadd.f32 %v1468, %v1470
        %v1597 = vadd.f32 %v1596, %v1472
        %v1598 = vadd.f32 %v1597, %v1474
        %v1599 = vadd.f32 %v1598, %v1476
        %v1600 = vadd.f32 %v1599, %v1478
        %v1601 = vadd.f32 %v1600, %v1480
        %v1602 = vadd.f32 %v1601, %v1482
        %v1603 = vadd.f32 %v1602, %v1484
        %v1604 = vadd.f32 %v1603, %v1486
        %v1605 = vadd.f32 %v1604, %v1488
        %v1606 = vadd.f32 %v1605, %v1490
        %v1607 = vadd.f32 %v1606, %v1492
        %v1608 = vadd.f32 %v1607, %v1494
        %v1609 = vadd.f32 %v1608, %v1496
        %v1610 = vadd.f32 %v1609, %v1498
        %v1611 = vadd.f32 %v1610, %v1500
        %v1612 = vadd.f32 %v1611, %v1502
        %v1613 = vadd.f32 %v1612, %v1504
        %v1614 = vadd.f32 %v1613, %v1506
        %v1615 = vadd.f32 %v1614, %v1508
        %v1616 = vadd.f32 %v1615, %v1510
        %v1617 = vadd.f32 %v1616, %v1512
        %v1618 = vadd.f32 %v1617, %v1514
        %v1619 = vadd.f32 %v1618, %v1516
        %v1620 = vadd.f32 %v1619, %v1518
        %v1621 = vadd.f32 %v1620, %v1520
        %v1622 = vadd.f32 %v1621, %v1522
        %v1623 = vadd.f32 %v1622, %v1524
        %v1624 = vadd.f32 %v1623, %v1526
        %v1625 = vadd.f32 %v1624, %v1528
        %v1626 = vadd.f32 %v1625, %v1530
        %v1627 = vadd.f32 %v1626, %v1532
        %v1628 = vadd.f32 %v1627, %v1534
        %v1629 = vadd.f32 %v1628, %v1536
        %v1630 = vadd.f32 %v1629, %v1538
        %v1631 = vadd.f32 %v1630, %v1540
        %v1632 = vadd.f32 %v1631, %v1542
        %v1633 = vadd.f32 %v1632, %v1544
        %v1634 = vadd.f32 %v1633, %v1546
        %v1635 = vadd.f32 %v1634, %v1548
        %v1636 = vadd.f32 %v1635, %v1550
        %v1637 = vadd.f32 %v1636, %v1552
        %v1638 = vadd.f32 %v1637, %v1554
        %v1639 = vadd.f32 %v1638, %v1556
        %v1640 = vadd.f32 %v1639, %v1558
        %v1641 = vadd.f32 %v1640, %v1560
        %v1642 = vadd.f32 %v1641, %v1562
        %v1643 = vadd.f32 %v1642, %v1564
        %v1644 = vadd.f32 %v1643, %v1566
        %v1645 = vadd.f32 %v1644, %v1568
        %v1646 = vadd.f32 %v1645, %v1570
        %v1647 = vadd.f32 %v1646, %v1572
        %v1648 = vadd.f32 %v1647, %v1574
        %v1649 = vadd.f32 %v1648, %v1576
        %v1650 = vadd.f32 %v1649, %v1578
        %v1651 = vadd.f32 %v1650, %v1580
        %v1652 = vadd.f32 %v1651, %v1582
        %v1653 = vadd.f32 %v1652, %v1584
        %v1654 = vadd.f32 %v1653, %v1586
        %v1655 = vadd.f32 %v1654, %v1588
        %v1656 = vadd.f32 %v1655, %v1590
        %v1657 = vadd.f32 %v1656, %v1592
        %v1658 = vadd.f32 %v1657, %v1594
        %v1659 = vrot.slane %v1658, 4
        %v1660 = vadd.f32 %v1658, %v1659
        %v1661 = vrot.slane %v1660, 2
        %v1662 = vadd.f32 %v1660, %v1661
        %v1663 = vrot.slane %v1662, 1
        %v1664 = vadd.f32 %v1662, %v1663
        %v1665 = vadd.f32 %v1469, %v1471
        %v1666 = vadd.f32 %v1665, %v1473
        %v1667 = vadd.f32 %v1666, %v1475
        %v1668 = vadd.f32 %v1667, %v1477
        %v1669 = vadd.f32 %v1668, %v1479
        %v1670 = vadd.f32 %v1669, %v1481
        %v1671 = vadd.f32 %v1670, %v1483
        %v1672 = vadd.f32 %v1671, %v1485
        %v1673 = vadd.f32 %v1672, %v1487
        %v1674 = vadd.f32 %v1673, %v1489
        %v1675 = vadd.f32 %v1674, %v1491
        %v1676 = vadd.f32 %v1675, %v1493
        %v1677 = vadd.f32 %v1676, %v1495
        %v1678 = vadd.f32 %v1677, %v1497
        %v1679 = vadd.f32 %v1678, %v1499
        %v1680 = vadd.f32 %v1679, %v1501
        %v1681 = vadd.f32 %v1680, %v1503
        %v1682 = vadd.f32 %v1681, %v1505
        %v1683 = vadd.f32 %v1682, %v1507
        %v1684 = vadd.f32 %v1683, %v1509
        %v1685 = vadd.f32 %v1684, %v1511
        %v1686 = vadd.f32 %v1685, %v1513
        %v1687 = vadd.f32 %v1686, %v1515
        %v1688 = vadd.f32 %v1687, %v1517
        %v1689 = vadd.f32 %v1688, %v1519
        %v1690 = vadd.f32 %v1689, %v1521
        %v1691 = vadd.f32 %v1690, %v1523
        %v1692 = vadd.f32 %v1691, %v1525
        %v1693 = vadd.f32 %v1692, %v1527
        %v1694 = vadd.f32 %v1693, %v1529
        %v1695 = vadd.f32 %v1694, %v1531
        %v1696 = vadd.f32 %v1695, %v1533
        %v1697 = vadd.f32 %v1696, %v1535
        %v1698 = vadd.f32 %v1697, %v1537
        %v1699 = vadd.f32 %v1698, %v1539
        %v1700 = vadd.f32 %v1699, %v1541
        %v1701 = vadd.f32 %v1700, %v1543
        %v1702 = vadd.f32 %v1701, %v1545
        %v1703 = vadd.f32 %v1702, %v1547
        %v1704 = vadd.f32 %v1703, %v1549
        %v1705 = vadd.f32 %v1704, %v1551
        %v1706 = vadd.f32 %v1705, %v1553
        %v1707 = vadd.f32 %v1706, %v1555
        %v1708 = vadd.f32 %v1707, %v1557
        %v1709 = vadd.f32 %v1708, %v1559
        %v1710 = vadd.f32 %v1709, %v1561
        %v1711 = vadd.f32 %v1710, %v1563
        %v1712 = vadd.f32 %v1711, %v1565
        %v1713 = vadd.f32 %v1712, %v1567
        %v1714 = vadd.f32 %v1713, %v1569
        %v1715 = vadd.f32 %v1714, %v1571
        %v1716 = vadd.f32 %v1715, %v1573
        %v1717 = vadd.f32 %v1716, %v1575
        %v1718 = vadd.f32 %v1717, %v1577
        %v1719 = vadd.f32 %v1718, %v1579
        %v1720 = vadd.f32 %v1719, %v1581
        %v1721 = vadd.f32 %v1720, %v1583
        %v1722 = vadd.f32 %v1721, %v1585
        %v1723 = vadd.f32 %v1722, %v1587
        %v1724 = vadd.f32 %v1723, %v1589
        %v1725 = vadd.f32 %v1724, %v1591
        %v1726 = vadd.f32 %v1725, %v1593
        %v1727 = vadd.f32 %v1726, %v1595
        %v1728 = vrot.slane %v1727, 4
        %v1729 = vadd.f32 %v1727, %v1728
        %v1730 = vrot.slane %v1729, 2
        %v1731 = vadd.f32 %v1729, %v1730
        %v1732 = vrot.slane %v1731, 1
        %v1733 = vadd.f32 %v1731, %v1732
        %1734 = vset.pattern.permute.xlu0 1
        %1735 = vperm.xlu0 %1734, %v1084
        %v1736 = vpop.permute.xlu0 %1735
        %1738 = vset.pattern.permute.xlu0 1
        %1739 = vperm.xlu0 %1738, %v1085
        %v1740 = vpop.permute.xlu0 %1739
        %1742 = vset.pattern.permute.xlu0 1
        %1743 = vperm.xlu0 %1742, %v1086
        %v1744 = vpop.permute.xlu0 %1743
        %1746 = vset.pattern.permute.xlu0 1
        %1747 = vperm.xlu0 %1746, %v1087
        %v1748 = vpop.permute.xlu0 %1747
        %1750 = vset.pattern.permute.xlu0 1
        %1751 = vperm.xlu0 %1750, %v1088
        %v1752 = vpop.permute.xlu0 %1751
        %1754 = vset.pattern.permute.xlu0 1
        %1755 = vperm.xlu0 %1754, %v1089
        %v1756 = vpop.permute.xlu0 %1755
        %1758 = vset.pattern.permute.xlu0 1
        %1759 = vperm.xlu0 %1758, %v1090
        %v1760 = vpop.permute.xlu0 %1759
        %1762 = vset.pattern.permute.xlu0 1
        %1763 = vperm.xlu0 %1762, %v1091
        %v1764 = vpop.permute.xlu0 %1763
        %1766 = vset.pattern.permute.xlu0 1
        %1767 = vperm.xlu0 %1766, %v1092
        %v1768 = vpop.permute.xlu0 %1767
        %1770 = vset.pattern.permute.xlu0 1
        %1771 = vperm.xlu0 %1770, %v1093
        %v1772 = vpop.permute.xlu0 %1771
        %1774 = vset.pattern.permute.xlu0 1
        %1775 = vperm.xlu0 %1774, %v1094
        %v1776 = vpop.permute.xlu0 %1775
        %1778 = vset.pattern.permute.xlu0 1
        %1779 = vperm.xlu0 %1778, %v1095
        %v1780 = vpop.permute.xlu0 %1779
        %1782 = vset.pattern.permute.xlu0 1
        %1783 = vperm.xlu0 %1782, %v1096
        %v1784 = vpop.permute.xlu0 %1783
        %1786 = vset.pattern.permute.xlu0 1
        %1787 = vperm.xlu0 %1786, %v1097
        %v1788 = vpop.permute.xlu0 %1787
        %1790 = vset.pattern.permute.xlu0 1
        %1791 = vperm.xlu0 %1790, %v1098
        %v1792 = vpop.permute.xlu0 %1791
        %1794 = vset.pattern.permute.xlu0 1
        %1795 = vperm.xlu0 %1794, %v1099
        %v1796 = vpop.permute.xlu0 %1795
        %1798 = vset.pattern.permute.xlu0 1
        %1799 = vperm.xlu0 %1798, %v1100
        %v1800 = vpop.permute.xlu0 %1799
        %1802 = vset.pattern.permute.xlu0 1
        %1803 = vperm.xlu0 %1802, %v1101
        %v1804 = vpop.permute.xlu0 %1803
        %1806 = vset.pattern.permute.xlu0 1
        %1807 = vperm.xlu0 %1806, %v1102
        %v1808 = vpop.permute.xlu0 %1807
        %1810 = vset.pattern.permute.xlu0 1
        %1811 = vperm.xlu0 %1810, %v1103
        %v1812 = vpop.permute.xlu0 %1811
        %1814 = vset.pattern.permute.xlu0 1
        %1815 = vperm.xlu0 %1814, %v1104
        %v1816 = vpop.permute.xlu0 %1815
        %1818 = vset.pattern.permute.xlu0 1
        %1819 = vperm.xlu0 %1818, %v1105
        %v1820 = vpop.permute.xlu0 %1819
        %1822 = vset.pattern.permute.xlu0 1
        %1823 = vperm.xlu0 %1822, %v1106
        %v1824 = vpop.permute.xlu0 %1823
        %1826 = vset.pattern.permute.xlu0 1
        %1827 = vperm.xlu0 %1826, %v1107
        %v1828 = vpop.permute.xlu0 %1827
        %1830 = vset.pattern.permute.xlu0 1
        %1831 = vperm.xlu0 %1830, %v1108
        %v1832 = vpop.permute.xlu0 %1831
        %1834 = vset.pattern.permute.xlu0 1
        %1835 = vperm.xlu0 %1834, %v1109
        %v1836 = vpop.permute.xlu0 %1835
        %1838 = vset.pattern.permute.xlu0 1
        %1839 = vperm.xlu0 %1838, %v1110
        %v1840 = vpop.permute.xlu0 %1839
        %1842 = vset.pattern.permute.xlu0 1
        %1843 = vperm.xlu0 %1842, %v1111
        %v1844 = vpop.permute.xlu0 %1843
        %1846 = vset.pattern.permute.xlu0 1
        %1847 = vperm.xlu0 %1846, %v1112
        %v1848 = vpop.permute.xlu0 %1847
        %1850 = vset.pattern.permute.xlu0 1
        %1851 = vperm.xlu0 %1850, %v1113
        %v1852 = vpop.permute.xlu0 %1851
        %1854 = vset.pattern.permute.xlu0 1
        %1855 = vperm.xlu0 %1854, %v1114
        %v1856 = vpop.permute.xlu0 %1855
        %1858 = vset.pattern.permute.xlu0 1
        %1859 = vperm.xlu0 %1858, %v1115
        %v1860 = vpop.permute.xlu0 %1859
        %1862 = vset.pattern.permute.xlu0 1
        %1863 = vperm.xlu0 %1862, %v1116
        %v1864 = vpop.permute.xlu0 %1863
        %1866 = vset.pattern.permute.xlu0 1
        %1867 = vperm.xlu0 %1866, %v1117
        %v1868 = vpop.permute.xlu0 %1867
        %1870 = vset.pattern.permute.xlu0 1
        %1871 = vperm.xlu0 %1870, %v1118
        %v1872 = vpop.permute.xlu0 %1871
        %1874 = vset.pattern.permute.xlu0 1
        %1875 = vperm.xlu0 %1874, %v1119
        %v1876 = vpop.permute.xlu0 %1875
        %1878 = vset.pattern.permute.xlu0 1
        %1879 = vperm.xlu0 %1878, %v1120
        %v1880 = vpop.permute.xlu0 %1879
        %1882 = vset.pattern.permute.xlu0 1
        %1883 = vperm.xlu0 %1882, %v1121
        %v1884 = vpop.permute.xlu0 %1883
        %1886 = vset.pattern.permute.xlu0 1
        %1887 = vperm.xlu0 %1886, %v1122
        %v1888 = vpop.permute.xlu0 %1887
        %1890 = vset.pattern.permute.xlu0 1
        %1891 = vperm.xlu0 %1890, %v1123
        %v1892 = vpop.permute.xlu0 %1891
        %1894 = vset.pattern.permute.xlu0 1
        %1895 = vperm.xlu0 %1894, %v1124
        %v1896 = vpop.permute.xlu0 %1895
        %1898 = vset.pattern.permute.xlu0 1
        %1899 = vperm.xlu0 %1898, %v1125
        %v1900 = vpop.permute.xlu0 %1899
        %1902 = vset.pattern.permute.xlu0 1
        %1903 = vperm.xlu0 %1902, %v1126
        %v1904 = vpop.permute.xlu0 %1903
        %1906 = vset.pattern.permute.xlu0 1
        %1907 = vperm.xlu0 %1906, %v1127
        %v1908 = vpop.permute.xlu0 %1907
        %1910 = vset.pattern.permute.xlu0 1
        %1911 = vperm.xlu0 %1910, %v1128
        %v1912 = vpop.permute.xlu0 %1911
        %1914 = vset.pattern.permute.xlu0 1
        %1915 = vperm.xlu0 %1914, %v1129
        %v1916 = vpop.permute.xlu0 %1915
        %1918 = vset.pattern.permute.xlu0 1
        %1919 = vperm.xlu0 %1918, %v1130
        %v1920 = vpop.permute.xlu0 %1919
        %1922 = vset.pattern.permute.xlu0 1
        %1923 = vperm.xlu0 %1922, %v1131
        %v1924 = vpop.permute.xlu0 %1923
        %1926 = vset.pattern.permute.xlu0 1
        %1927 = vperm.xlu0 %1926, %v1132
        %v1928 = vpop.permute.xlu0 %1927
        %1930 = vset.pattern.permute.xlu0 1
        %1931 = vperm.xlu0 %1930, %v1133
        %v1932 = vpop.permute.xlu0 %1931
        %1934 = vset.pattern.permute.xlu0 1
        %1935 = vperm.xlu0 %1934, %v1134
        %v1936 = vpop.permute.xlu0 %1935
        %1938 = vset.pattern.permute.xlu0 1
        %1939 = vperm.xlu0 %1938, %v1135
        %v1940 = vpop.permute.xlu0 %1939
        %1942 = vset.pattern.permute.xlu0 1
        %1943 = vperm.xlu0 %1942, %v1136
        %v1944 = vpop.permute.xlu0 %1943
        %1946 = vset.pattern.permute.xlu0 1
        %1947 = vperm.xlu0 %1946, %v1137
        %v1948 = vpop.permute.xlu0 %1947
        %1950 = vset.pattern.permute.xlu0 1
        %1951 = vperm.xlu0 %1950, %v1138
        %v1952 = vpop.permute.xlu0 %1951
        %1954 = vset.pattern.permute.xlu0 1
        %1955 = vperm.xlu0 %1954, %v1139
        %v1956 = vpop.permute.xlu0 %1955
        %1958 = vset.pattern.permute.xlu0 1
        %1959 = vperm.xlu0 %1958, %v1140
        %v1960 = vpop.permute.xlu0 %1959
        %1962 = vset.pattern.permute.xlu0 1
        %1963 = vperm.xlu0 %1962, %v1141
        %v1964 = vpop.permute.xlu0 %1963
        %1966 = vset.pattern.permute.xlu0 1
        %1967 = vperm.xlu0 %1966, %v1142
        %v1968 = vpop.permute.xlu0 %1967
        %1970 = vset.pattern.permute.xlu0 1
        %1971 = vperm.xlu0 %1970, %v1143
        %v1972 = vpop.permute.xlu0 %1971
        %1974 = vset.pattern.permute.xlu0 1
        %1975 = vperm.xlu0 %1974, %v1144
        %v1976 = vpop.permute.xlu0 %1975
        %1978 = vset.pattern.permute.xlu0 1
        %1979 = vperm.xlu0 %1978, %v1145
        %v1980 = vpop.permute.xlu0 %1979
        %1982 = vset.pattern.permute.xlu0 1
        %1983 = vperm.xlu0 %1982, %v1146
        %v1984 = vpop.permute.xlu0 %1983
        %1986 = vset.pattern.permute.xlu0 1
        %1987 = vperm.xlu0 %1986, %v1147
        %v1988 = vpop.permute.xlu0 %1987
        %v1990 = vmul.f32 %v1736, %v956
        %v1991 = vmul.f32 %v1736, %v957
        %v1992 = vmul.f32 %v1740, %v958
        %v1993 = vmul.f32 %v1740, %v959
        %v1994 = vmul.f32 %v1744, %v960
        %v1995 = vmul.f32 %v1744, %v961
        %v1996 = vmul.f32 %v1748, %v962
        %v1997 = vmul.f32 %v1748, %v963
        %v1998 = vmul.f32 %v1752, %v964
        %v1999 = vmul.f32 %v1752, %v965
        %v2000 = vmul.f32 %v1756, %v966
        %v2001 = vmul.f32 %v1756, %v967
        %v2002 = vmul.f32 %v1760, %v968
        %v2003 = vmul.f32 %v1760, %v969
        %v2004 = vmul.f32 %v1764, %v970
        %v2005 = vmul.f32 %v1764, %v971
        %v2006 = vmul.f32 %v1768, %v972
        %v2007 = vmul.f32 %v1768, %v973
        %v2008 = vmul.f32 %v1772, %v974
        %v2009 = vmul.f32 %v1772, %v975
        %v2010 = vmul.f32 %v1776, %v976
        %v2011 = vmul.f32 %v1776, %v977
        %v2012 = vmul.f32 %v1780, %v978
        %v2013 = vmul.f32 %v1780, %v979
        %v2014 = vmul.f32 %v1784, %v980
        %v2015 = vmul.f32 %v1784, %v981
        %v2016 = vmul.f32 %v1788, %v982
        %v2017 = vmul.f32 %v1788, %v983
        %v2018 = vmul.f32 %v1792, %v984
        %v2019 = vmul.f32 %v1792, %v985
        %v2020 = vmul.f32 %v1796, %v986
        %v2021 = vmul.f32 %v1796, %v987
        %v2022 = vmul.f32 %v1800, %v988
        %v2023 = vmul.f32 %v1800, %v989
        %v2024 = vmul.f32 %v1804, %v990
        %v2025 = vmul.f32 %v1804, %v991
        %v2026 = vmul.f32 %v1808, %v992
        %v2027 = vmul.f32 %v1808, %v993
        %v2028 = vmul.f32 %v1812, %v994
        %v2029 = vmul.f32 %v1812, %v995
        %v2030 = vmul.f32 %v1816, %v996
        %v2031 = vmul.f32 %v1816, %v997
        %v2032 = vmul.f32 %v1820, %v998
        %v2033 = vmul.f32 %v1820, %v999
        %v2034 = vmul.f32 %v1824, %v1000
        %v2035 = vmul.f32 %v1824, %v1001
        %v2036 = vmul.f32 %v1828, %v1002
        %v2037 = vmul.f32 %v1828, %v1003
        %v2038 = vmul.f32 %v1832, %v1004
        %v2039 = vmul.f32 %v1832, %v1005
        %v2040 = vmul.f32 %v1836, %v1006
        %v2041 = vmul.f32 %v1836, %v1007
        %v2042 = vmul.f32 %v1840, %v1008
        %v2043 = vmul.f32 %v1840, %v1009
        %v2044 = vmul.f32 %v1844, %v1010
        %v2045 = vmul.f32 %v1844, %v1011
        %v2046 = vmul.f32 %v1848, %v1012
        %v2047 = vmul.f32 %v1848, %v1013
        %v2048 = vmul.f32 %v1852, %v1014
        %v2049 = vmul.f32 %v1852, %v1015
        %v2050 = vmul.f32 %v1856, %v1016
        %v2051 = vmul.f32 %v1856, %v1017
        %v2052 = vmul.f32 %v1860, %v1018
        %v2053 = vmul.f32 %v1860, %v1019
        %v2054 = vmul.f32 %v1864, %v1020
        %v2055 = vmul.f32 %v1864, %v1021
        %v2056 = vmul.f32 %v1868, %v1022
        %v2057 = vmul.f32 %v1868, %v1023
        %v2058 = vmul.f32 %v1872, %v1024
        %v2059 = vmul.f32 %v1872, %v1025
        %v2060 = vmul.f32 %v1876, %v1026
        %v2061 = vmul.f32 %v1876, %v1027
        %v2062 = vmul.f32 %v1880, %v1028
        %v2063 = vmul.f32 %v1880, %v1029
        %v2064 = vmul.f32 %v1884, %v1030
        %v2065 = vmul.f32 %v1884, %v1031
        %v2066 = vmul.f32 %v1888, %v1032
        %v2067 = vmul.f32 %v1888, %v1033
        %v2068 = vmul.f32 %v1892, %v1034
        %v2069 = vmul.f32 %v1892, %v1035
        %v2070 = vmul.f32 %v1896, %v1036
        %v2071 = vmul.f32 %v1896, %v1037
        %v2072 = vmul.f32 %v1900, %v1038
        %v2073 = vmul.f32 %v1900, %v1039
        %v2074 = vmul.f32 %v1904, %v1040
        %v2075 = vmul.f32 %v1904, %v1041
        %v2076 = vmul.f32 %v1908, %v1042
        %v2077 = vmul.f32 %v1908, %v1043
        %v2078 = vmul.f32 %v1912, %v1044
        %v2079 = vmul.f32 %v1912, %v1045
        %v2080 = vmul.f32 %v1916, %v1046
        %v2081 = vmul.f32 %v1916, %v1047
        %v2082 = vmul.f32 %v1920, %v1048
        %v2083 = vmul.f32 %v1920, %v1049
        %v2084 = vmul.f32 %v1924, %v1050
        %v2085 = vmul.f32 %v1924, %v1051
        %v2086 = vmul.f32 %v1928, %v1052
        %v2087 = vmul.f32 %v1928, %v1053
        %v2088 = vmul.f32 %v1932, %v1054
        %v2089 = vmul.f32 %v1932, %v1055
        %v2090 = vmul.f32 %v1936, %v1056
        %v2091 = vmul.f32 %v1936, %v1057
        %v2092 = vmul.f32 %v1940, %v1058
        %v2093 = vmul.f32 %v1940, %v1059
        %v2094 = vmul.f32 %v1944, %v1060
        %v2095 = vmul.f32 %v1944, %v1061
        %v2096 = vmul.f32 %v1948, %v1062
        %v2097 = vmul.f32 %v1948, %v1063
        %v2098 = vmul.f32 %v1952, %v1064
        %v2099 = vmul.f32 %v1952, %v1065
        %v2100 = vmul.f32 %v1956, %v1066
        %v2101 = vmul.f32 %v1956, %v1067
        %v2102 = vmul.f32 %v1960, %v1068
        %v2103 = vmul.f32 %v1960, %v1069
        %v2104 = vmul.f32 %v1964, %v1070
        %v2105 = vmul.f32 %v1964, %v1071
        %v2106 = vmul.f32 %v1968, %v1072
        %v2107 = vmul.f32 %v1968, %v1073
        %v2108 = vmul.f32 %v1972, %v1074
        %v2109 = vmul.f32 %v1972, %v1075
        %v2110 = vmul.f32 %v1976, %v1076
        %v2111 = vmul.f32 %v1976, %v1077
        %v2112 = vmul.f32 %v1980, %v1078
        %v2113 = vmul.f32 %v1980, %v1079
        %v2114 = vmul.f32 %v1984, %v1080
        %v2115 = vmul.f32 %v1984, %v1081
        %v2116 = vmul.f32 %v1988, %v1082
        %v2117 = vmul.f32 %v1988, %v1083
        %v2118 = vadd.f32 %v1990, %v1992
        %v2119 = vadd.f32 %v2118, %v1994
        %v2120 = vadd.f32 %v2119, %v1996
        %v2121 = vadd.f32 %v2120, %v1998
        %v2122 = vadd.f32 %v2121, %v2000
        %v2123 = vadd.f32 %v2122, %v2002
        %v2124 = vadd.f32 %v2123, %v2004
        %v2125 = vadd.f32 %v2124, %v2006
        %v2126 = vadd.f32 %v2125, %v2008
        %v2127 = vadd.f32 %v2126, %v2010
        %v2128 = vadd.f32 %v2127, %v2012
        %v2129 = vadd.f32 %v2128, %v2014
        %v2130 = vadd.f32 %v2129, %v2016
        %v2131 = vadd.f32 %v2130, %v2018
        %v2132 = vadd.f32 %v2131, %v2020
        %v2133 = vadd.f32 %v2132, %v2022
        %v2134 = vadd.f32 %v2133, %v2024
        %v2135 = vadd.f32 %v2134, %v2026
        %v2136 = vadd.f32 %v2135, %v2028
        %v2137 = vadd.f32 %v2136, %v2030
        %v2138 = vadd.f32 %v2137, %v2032
        %v2139 = vadd.f32 %v2138, %v2034
        %v2140 = vadd.f32 %v2139, %v2036
        %v2141 = vadd.f32 %v2140, %v2038
        %v2142 = vadd.f32 %v2141, %v2040
        %v2143 = vadd.f32 %v2142, %v2042
        %v2144 = vadd.f32 %v2143, %v2044
        %v2145 = vadd.f32 %v2144, %v2046
        %v2146 = vadd.f32 %v2145, %v2048
        %v2147 = vadd.f32 %v2146, %v2050
        %v2148 = vadd.f32 %v2147, %v2052
        %v2149 = vadd.f32 %v2148, %v2054
        %v2150 = vadd.f32 %v2149, %v2056
        %v2151 = vadd.f32 %v2150, %v2058
        %v2152 = vadd.f32 %v2151, %v2060
        %v2153 = vadd.f32 %v2152, %v2062
        %v2154 = vadd.f32 %v2153, %v2064
        %v2155 = vadd.f32 %v2154, %v2066
        %v2156 = vadd.f32 %v2155, %v2068
        %v2157 = vadd.f32 %v2156, %v2070
        %v2158 = vadd.f32 %v2157, %v2072
        %v2159 = vadd.f32 %v2158, %v2074
        %v2160 = vadd.f32 %v2159, %v2076
        %v2161 = vadd.f32 %v2160, %v2078
        %v2162 = vadd.f32 %v2161, %v2080
        %v2163 = vadd.f32 %v2162, %v2082
        %v2164 = vadd.f32 %v2163, %v2084
        %v2165 = vadd.f32 %v2164, %v2086
        %v2166 = vadd.f32 %v2165, %v2088
        %v2167 = vadd.f32 %v2166, %v2090
        %v2168 = vadd.f32 %v2167, %v2092
        %v2169 = vadd.f32 %v2168, %v2094
        %v2170 = vadd.f32 %v2169, %v2096
        %v2171 = vadd.f32 %v2170, %v2098
        %v2172 = vadd.f32 %v2171, %v2100
        %v2173 = vadd.f32 %v2172, %v2102
        %v2174 = vadd.f32 %v2173, %v2104
        %v2175 = vadd.f32 %v2174, %v2106
        %v2176 = vadd.f32 %v2175, %v2108
        %v2177 = vadd.f32 %v2176, %v2110
        %v2178 = vadd.f32 %v2177, %v2112
        %v2179 = vadd.f32 %v2178, %v2114
        %v2180 = vadd.f32 %v2179, %v2116
        %v2181 = vrot.slane %v2180, 4
        %v2182 = vadd.f32 %v2180, %v2181
        %v2183 = vrot.slane %v2182, 2
        %v2184 = vadd.f32 %v2182, %v2183
        %v2185 = vrot.slane %v2184, 1
        %v2186 = vadd.f32 %v2184, %v2185
        %v2187 = vadd.f32 %v1991, %v1993
        %v2188 = vadd.f32 %v2187, %v1995
        %v2189 = vadd.f32 %v2188, %v1997
        %v2190 = vadd.f32 %v2189, %v1999
        %v2191 = vadd.f32 %v2190, %v2001
        %v2192 = vadd.f32 %v2191, %v2003
        %v2193 = vadd.f32 %v2192, %v2005
        %v2194 = vadd.f32 %v2193, %v2007
        %v2195 = vadd.f32 %v2194, %v2009
        %v2196 = vadd.f32 %v2195, %v2011
        %v2197 = vadd.f32 %v2196, %v2013
        %v2198 = vadd.f32 %v2197, %v2015
        %v2199 = vadd.f32 %v2198, %v2017
        %v2200 = vadd.f32 %v2199, %v2019
        %v2201 = vadd.f32 %v2200, %v2021
        %v2202 = vadd.f32 %v2201, %v2023
        %v2203 = vadd.f32 %v2202, %v2025
        %v2204 = vadd.f32 %v2203, %v2027
        %v2205 = vadd.f32 %v2204, %v2029
        %v2206 = vadd.f32 %v2205, %v2031
        %v2207 = vadd.f32 %v2206, %v2033
        %v2208 = vadd.f32 %v2207, %v2035
        %v2209 = vadd.f32 %v2208, %v2037
        %v2210 = vadd.f32 %v2209, %v2039
        %v2211 = vadd.f32 %v2210, %v2041
        %v2212 = vadd.f32 %v2211, %v2043
        %v2213 = vadd.f32 %v2212, %v2045
        %v2214 = vadd.f32 %v2213, %v2047
        %v2215 = vadd.f32 %v2214, %v2049
        %v2216 = vadd.f32 %v2215, %v2051
        %v2217 = vadd.f32 %v2216, %v2053
        %v2218 = vadd.f32 %v2217, %v2055
        %v2219 = vadd.f32 %v2218, %v2057
        %v2220 = vadd.f32 %v2219, %v2059
        %v2221 = vadd.f32 %v2220, %v2061
        %v2222 = vadd.f32 %v2221, %v2063
        %v2223 = vadd.f32 %v2222, %v2065
        %v2224 = vadd.f32 %v2223, %v2067
        %v2225 = vadd.f32 %v2224, %v2069
        %v2226 = vadd.f32 %v2225, %v2071
        %v2227 = vadd.f32 %v2226, %v2073
        %v2228 = vadd.f32 %v2227, %v2075
        %v2229 = vadd.f32 %v2228, %v2077
        %v2230 = vadd.f32 %v2229, %v2079
        %v2231 = vadd.f32 %v2230, %v2081
        %v2232 = vadd.f32 %v2231, %v2083
        %v2233 = vadd.f32 %v2232, %v2085
        %v2234 = vadd.f32 %v2233, %v2087
        %v2235 = vadd.f32 %v2234, %v2089
        %v2236 = vadd.f32 %v2235, %v2091
        %v2237 = vadd.f32 %v2236, %v2093
        %v2238 = vadd.f32 %v2237, %v2095
        %v2239 = vadd.f32 %v2238, %v2097
        %v2240 = vadd.f32 %v2239, %v2099
        %v2241 = vadd.f32 %v2240, %v2101
        %v2242 = vadd.f32 %v2241, %v2103
        %v2243 = vadd.f32 %v2242, %v2105
        %v2244 = vadd.f32 %v2243, %v2107
        %v2245 = vadd.f32 %v2244, %v2109
        %v2246 = vadd.f32 %v2245, %v2111
        %v2247 = vadd.f32 %v2246, %v2113
        %v2248 = vadd.f32 %v2247, %v2115
        %v2249 = vadd.f32 %v2248, %v2117
        %v2250 = vrot.slane %v2249, 4
        %v2251 = vadd.f32 %v2249, %v2250
        %v2252 = vrot.slane %v2251, 2
        %v2253 = vadd.f32 %v2251, %v2252
        %v2254 = vrot.slane %v2253, 1
        %v2255 = vadd.f32 %v2253, %v2254
        %vm2256 = vcmask 1040384
        %v2257 = vsel %vm2256, %v1664, %v2186
        %v2258 = vsel %vm2256, %v1733, %v2255
        %v2261 = vcombine.low %v2257, %v2258
        %v2263 = vunpack.c.l.s4 1983009808
        %v2264 = vunpack.c.0.s8 %v2263
        %v2265 = vlaneseq
        %v2266 = vshrl.u32 %v2265, 7
        %v2267 = vsub.s32 %v2264, %v2266
        %v2268 = vrot.slane %v2261, %v2267
        %2270 = vst [vmem:[%s248] sm:$0xf] %v2268
        %v2271 = vld [vmem:[%s3] sm:$0x1f]
        %v2272 = vld [vmem:[%s3 + $0x8] sm:$0x1f]
        %2273 = vrot.lane.b32.xlu0 %v2257, 1
        %v2274 = vpop.permute.xlu0 %2273
        %2275 = vrot.lane.b32.xlu0 %v2258, 1
        %v2276 = vpop.permute.xlu0 %2275
        %v2277 = vlaneseq
        %v2278 = vand.u32 %v2277, 127
        %vm2279 = vcmp.lt.s32.totalorder %v2278, 1
        %v2280 = vsel %vm2279, %v2274, %v2276
        %v2281 = vsel %vm2279, %v2276, %v2274
        %2282 = vrot.lane.b32.xlu0 %v2257, 127
        %v2283 = vpop.permute.xlu0 %2282
        %2284 = vrot.lane.b32.xlu0 %v2258, 127
        %v2285 = vpop.permute.xlu0 %2284
        %vm2286 = vcmp.lt.s32.totalorder %v2278, 127
        %v2287 = vsel %vm2286, %v2283, %v2285
        %v2288 = vsel %vm2286, %v2285, %v2283
        %vm2289 = vcmp.gt.f32.partialorder %v2271, 0.5
        %vm2290 = vcmp.gt.f32.partialorder %v2272, 0.5
        %v2291 = vlaneseq
        %v2292 = vshrl.u32 %v2291, 7
        %v2293 = vsub.s32 1, %v2292
        %v2294 = vrot.slane %v2271, %v2293
        %v2295 = vlaneseq
        %v2296 = vshrl.u32 %v2295, 7
        %v2297 = vsub.s32 1, %v2296
        %v2298 = vrot.slane %v2272, %v2297
        %v2299 = vmul.f32 %v2294, %v2287
        %v2300 = vmul.f32 %v2298, %v2288
        %v2301 = vlaneseq
        %v2302 = vshrl.u32 %v2301, 7
        %v2303 = vsub.s32 2, %v2302
        %v2304 = vrot.slane %v2271, %v2303
        %v2305 = vlaneseq
        %v2306 = vshrl.u32 %v2305, 7
        %v2307 = vsub.s32 2, %v2306
        %v2308 = vrot.slane %v2272, %v2307
        %v2309 = vmul.f32 %v2304, %v2281
        %v2310 = vmul.f32 %v2308, %v2280
        %v2311 = vsel %vm2289, 1, 0
        %v2312 = vsel %vm2290, 1, 0
        %v2313 = vlaneseq
        %v2314 = vshrl.u32 %v2313, 7
        %v2315 = vsub.s32 4, %v2314
        %v2316 = vrot.slane %v2311, %v2315
        %v2317 = vlaneseq
        %v2318 = vshrl.u32 %v2317, 7
        %v2319 = vsub.s32 4, %v2318
        %v2320 = vrot.slane %v2312, %v2319
        %vm2321 = vcmp.eq.s32.totalorder %v2316, 1
        %vm2322 = vcmp.eq.s32.totalorder %v2320, 1
        %v2323 = vsel %vm2321, %v2299, %v2309
        %v2324 = vsel %vm2322, %v2300, %v2310
        %v2325 = vlaneseq
        %v2326 = vshrl.u32 %v2325, 7
        %v2327 = vsub.s32 0, %v2326
        %v2328 = vrot.slane %v2271, %v2327
        %v2329 = vlaneseq
        %v2330 = vshrl.u32 %v2329, 7
        %v2331 = vsub.s32 0, %v2330
        %v2332 = vrot.slane %v2272, %v2331
        %v2333 = vmul.f32 %v2257, %v2328
        %v2334 = vmul.f32 %v2258, %v2332
        %v2335 = vadd.f32 %v2333, %v2323
        %v2336 = vadd.f32 %v2334, %v2324
        %v2337 = vlaneseq
        %v2338 = vshrl.u32 %v2337, 7
        %v2339 = vsub.s32 3, %v2338
        %v2340 = vrot.slane %v2271, %v2339
        %v2341 = vlaneseq
        %v2342 = vshrl.u32 %v2341, 7
        %v2343 = vsub.s32 3, %v2342
        %v2344 = vrot.slane %v2272, %v2343
        %v2345 = vadd.f32 %v2335, %v2340
        %v2346 = vadd.f32 %v2336, %v2344
        %v2349 = vcombine.low %v2345, %v2346
        %v2351 = vunpack.c.l.s4 1983009808
        %v2352 = vunpack.c.0.s8 %v2351
        %v2353 = vlaneseq
        %v2354 = vshrl.u32 %v2353, 7
        %v2355 = vsub.s32 %v2352, %v2354
        %v2356 = vrot.slane %v2349, %v2355
        %2358 = vst [vmem:[%s255] sm:$0xf] %v2356
        %s2359 = sand.u32 %s136, 1
        %s2360 = scalar_lea.sflag [#allocation3], %s2359
        %s2361 = sand.u32 %s136, 1
        %s2362 = smul.addr %s2361, 4
        %s2363 = scalar_lea.vmem [#allocation2], %s2362
        %s2364 = sand.u32 %s164, 1
        %s2365 = scalar_lea.sflag [#allocation5], %s2364
        %s2366 = sand.u32 %s164, 1
        %s2367 = smul.addr %s2366, 4
        %s2368 = scalar_lea.vmem [#allocation4], %s2367
        // Predicated region
        $region37: #{tpu_custom_call.1} parent=35 // pred_check
          %p2369 = pneg %p146
        $region38: #{tpu_custom_call.1} parent=35 // pred_check_branch
          %2371 = sbr.rel (%p2369) target = $region40
        $region39: #{tpu_custom_call.1} parent=35 // pred_region
          %s2372 = smul.u32 2, %s28
          %s2374 = ssub.s32 64, 64
          %2375 = vsyncadd %s2360, %s2374
          %s2376 = smul.addr %s27, 2
          %s2377 = sadd.s32 %s2372, %s2376
          %s2378 = smul.addr %s2377, 32
          %s2379 = scalar_lea.hbm %s4, %s2378
          %s2381 = sshll.u32 %s2363, 4
          %s2382 = int_to_ptr.vmem [resolvable:$true] %s2381
          %2384 = dma.vmem_to_hbm [thread:$0]  %s2382, 64, %s2379, %s2360
        $region40: #{tpu_custom_call.1} parent=35 // pred_fallthru
          _
        // Predicated region
        $region41: #{tpu_custom_call.1} parent=35 // pred_check
          %p2385 = pneg %p174
        $region42: #{tpu_custom_call.1} parent=35 // pred_check_branch
          %2387 = sbr.rel (%p2385) target = $region44
        $region43: #{tpu_custom_call.1} parent=35 // pred_region
          %s2388 = smul.u32 2, %s28
          %s2390 = ssub.s32 64, 64
          %2391 = vsyncadd %s2365, %s2390
          %s2392 = smul.addr %s27, 2
          %s2393 = sadd.s32 %s2388, %s2392
          %s2394 = smul.addr %s2393, 32
          %s2395 = scalar_lea.hbm %s5, %s2394
          %s2397 = sshll.u32 %s2368, 4
          %s2398 = int_to_ptr.vmem [resolvable:$true] %s2397
          %2400 = dma.vmem_to_hbm [thread:$0]  %s2398, 64, %s2395, %s2365
        $region44: #{tpu_custom_call.1} parent=35 // pred_fallthru
          _
      $region36: #{tpu_custom_call.1} parent=5 // pred_fallthru
        _
      %p2401 = scmp.le.s32.totalorder 2, %s18
      // Predicated region
      $region45: #{tpu_custom_call.1} parent=5 // pred_check
        %p2402 = pneg %p2401
      $region46: #{tpu_custom_call.1} parent=5 // pred_check_branch
        %2404 = sbr.rel (%p2402) target = $region48
      $region47: #{tpu_custom_call.1} parent=5 // pred_region
        %s2405 = ssub.s32 %s18, 2
        // Predicated region
        $region49: #{tpu_custom_call.1} parent=47 // pred_check
          %p2406 = pneg %p152
        $region50: #{tpu_custom_call.1} parent=47 // pred_check_branch
          %2408 = sbr.rel (%p2406) target = $region52
        $region51: #{tpu_custom_call.1} parent=47 // pred_region
          %s2409 = sand.u32 %s137, 1
          %s2410 = scalar_lea.sflag [#allocation3], %s2409
          %s2411 = sand.u32 %s137, 1
          %s2412 = smul.addr %s2411, 4
          %s2413 = scalar_lea.vmem [#allocation2], %s2412
          %2414 = dma.done %s2410, 64
        $region52: #{tpu_custom_call.1} parent=47 // pred_fallthru
          _
        // Predicated region
        $region53: #{tpu_custom_call.1} parent=47 // pred_check
          %p2415 = pneg %p180
        $region54: #{tpu_custom_call.1} parent=47 // pred_check_branch
          %2417 = sbr.rel (%p2415) target = $region56
        $region55: #{tpu_custom_call.1} parent=47 // pred_region
          %s2418 = sand.u32 %s165, 1
          %s2419 = scalar_lea.sflag [#allocation5], %s2418
          %s2420 = sand.u32 %s165, 1
          %s2421 = smul.addr %s2420, 4
          %s2422 = scalar_lea.vmem [#allocation4], %s2421
          %2423 = dma.done %s2419, 64
        $region56: #{tpu_custom_call.1} parent=47 // pred_fallthru
          _
      $region48: #{tpu_custom_call.1} parent=5 // pred_fallthru
        _
    $region6: #{tpu_custom_call.1} parent=1 // loop_footer
      %s22 = sadd.s32 1, %s18
    $region7: #{tpu_custom_call.1} parent=1 // loop_footer_branch
      %17 = sbr.rel target = $region3
    $region8: #{tpu_custom_call.1} parent=1 // loop_exit
      _
    %2424 = vsyncpa [#allocation3], 1
    %s2425 = scalar_lea.sflag [#allocation3], 1
    %2426 = vsyncpa %s2425, 1
    %2427 = vsyncpa [#allocation5], 1
    %s2428 = scalar_lea.sflag [#allocation5], 1
    %2429 = vsyncpa %s2428, 1

</llo_original>
